<compile_context>
chip_gen: v6e
topology: v6e:2x2x1
jax: 0.10.0
libtpu: 0.0.40
codegen_flags: <defaults>
</compile_context>

<pallas_src>
import math

import jax
import jax.numpy as jnp
from jax.experimental import pallas as pl
from jax.experimental.pallas import tpu as pltpu

_LANE = 128          # pad channel / feature dims to the 128-lane width
_TILE_ROWS = 512     # max rows per grid step (fits v7x 64 MiB VMEM w/ margin)
_PARALLEL = pltpu.CompilerParams(dimension_semantics=("parallel",))


def _round_up(x, m):
    return ((x + m - 1) // m) * m


def _row_tiles(m):
    """Pick a row tile <= _TILE_ROWS. Returns (tile, num_tiles, padded_rows)."""
    if m <= _TILE_ROWS:
        return m, 1, m
    tile = _TILE_ROWS
    num = pl.cdiv(m, tile)
    return tile, num, num * tile


# --------------------------------------------------------------- kernels ----

def _conv_pool_kernel(p_ref, w_ref, b_ref, o_ref):
    """Fused conv (as matmul) + bias + ReLU + 2x2 max-pool.

    p_ref: (4, TM, K)  im2col patches, axis 0 = position in the 2x2 pool window
    w_ref: (K, 128)    flattened conv weights (K and Cout zero-padded)
    b_ref: (1, 128)
    o_ref: (TM, 128)   pooled activations (lane-dense store)
    """
    w = w_ref[...]
    b = b_ref[...]
    out = None
    for t in range(4):  # unrolled: 4 MXU matmuls + VPU max epilogue
        acc = jnp.dot(p_ref[t], w, preferred_element_type=jnp.float32)
        act = jnp.maximum(acc + b, 0.0)
        out = act if out is None else jnp.maximum(out, act)
    o_ref[...] = out


def _mlp_head_kernel(x_ref, w1_ref, b1_ref, w2_ref, b2_ref, w3_ref, b3_ref,
                     o_ref):
    h = jnp.dot(x_ref[...], w1_ref[...], preferred_element_type=jnp.float32)
    h = jnp.maximum(h + b1_ref[...], 0.0)                       # fc1 + relu
    h = jnp.dot(h, w2_ref[...], preferred_element_type=jnp.float32)
    h = jnp.maximum(h + b2_ref[...], 0.0)                       # fc2 + relu
    # TODO(synk): train-mode stochastic dropout (pltpu.prng_*) not implemented;
    # Dropout(p=0.5) is the identity at inference time.
    o = jnp.dot(h, w3_ref[...], preferred_element_type=jnp.float32)
    o_ref[...] = o + b3_ref[...]                                # fc3


# -------------------------------------------------------------- wrappers ----

def conv_relu_pool(patches, w, b):
    """patches: (4, M, Kp); w: (Kp, 128); b: (1, 128) -> (M, 128)."""
    _, M, Kp = patches.shape
    Co = w.shape[1]
    tile, num, Mp = _row_tiles(M)
    if Mp != M:
        patches = jnp.pad(patches, ((0, 0), (0, Mp - M), (0, 0)))
    out = pl.pallas_call(
        _conv_pool_kernel,
        out_shape=jax.ShapeDtypeStruct((Mp, Co), jnp.float32),
        grid=(num,),
        in_specs=[pl.BlockSpec((4, tile, Kp), lambda i: (0, i, 0)),
                  pl.BlockSpec((Kp, Co), lambda i: (0, 0)),
                  pl.BlockSpec((1, Co), lambda i: (0, 0))],
        out_specs=pl.BlockSpec((tile, Co), lambda i: (i, 0)),
        compiler_params=_PARALLEL,
    )(patches, w, b)
    return out if Mp == M else out[:M]


def mlp_head(x, w1, b1, w2, b2, w3, b3):
    N, F = x.shape
    O = w3.shape[1]
    tile, num, Np = _row_tiles(N)
    if Np != N:
        x = jnp.pad(x, ((0, Np - N), (0, 0)))
    out = pl.pallas_call(
        _mlp_head_kernel,
        out_shape=jax.ShapeDtypeStruct((Np, O), jnp.float32),
        grid=(num,),
        in_specs=[pl.BlockSpec((tile, F), lambda i: (i, 0)),
                  pl.BlockSpec(w1.shape, lambda i: (0, 0)),
                  pl.BlockSpec(b1.shape, lambda i: (0, 0)),
                  pl.BlockSpec(w2.shape, lambda i: (0, 0)),
                  pl.BlockSpec(b2.shape, lambda i: (0, 0)),
                  pl.BlockSpec(w3.shape, lambda i: (0, 0)),
                  pl.BlockSpec(b3.shape, lambda i: (0, 0))],
        out_specs=pl.BlockSpec((tile, O), lambda i: (i, 0)),
        compiler_params=_PARALLEL,
    )(x, w1, b1, w2, b2, w3, b3)
    return out if Np == N else out[:N]


# ------------------------------------------------------------------ glue ----

def _pool_grouped_patches(xp, ks, k_pad):
    """Padded NHWC (N,H,W,C) -> im2col patches grouped by 2x2 pool position.

    Returns ((4, N*Hp*Wp, k_pad), (Hp, Wp)).  Only conv outputs that survive
    floor-mode pooling are materialized (matches F.max_pool2d(x, 2)).
    # TODO(synk): form these windows in-kernel (DMA the padded NHWC tile to
    # VMEM) to remove the ks*ks host-side patch blow-up at large batch.
    """
    N, H, W, C = xp.shape
    Ho, Wo = H - ks + 1, W - ks + 1
    Hp, Wp = Ho // 2, Wo // 2
    groups = []
    for dy in (0, 1):
        for dx in (0, 1):
            cols = [xp[:, dy + ki: dy + ki + 2 * Hp: 2,
                        dx + kj: dx + kj + 2 * Wp: 2, :]
                    for ki in range(ks) for kj in range(ks)]
            g = jnp.stack(cols, axis=3)              # (N, Hp, Wp, ks*ks, C)
            groups.append(g.reshape(N * Hp * Wp, ks * ks * C))
    p = jnp.stack(groups, axis=0)                    # (4, M, ks*ks*C)
    k = ks * ks * C
    if k_pad > k:
        p = jnp.pad(p, ((0, 0), (0, 0), (0, k_pad - k)))
    return p, (Hp, Wp)


def init_lenet_params(key, in_chan, out_chan, imsize, kernel_size=5):
    """Logical (PyTorch-layout) parameters with PyTorch/LeNet init."""
    ks = kernel_size
    z = int(0.5 * (0.5 * (imsize - 2) - 2))
    k1, k2, k3, k4, k5 = jax.random.split(key, 5)

    def conv_params(k, cin, cout):
        bound = 1.0 / math.sqrt(cin * ks * ks)       # PyTorch Conv2d default
        kw, kb = jax.random.split(k)
        w = jax.random.uniform(kw, (cout, cin, ks, ks), jnp.float32,
                               -bound, bound)
        b = jax.random.uniform(kb, (cout,), jnp.float32, -bound, bound)
        return w, b

    def linear_params(k, fin, fout):
        bound = math.sqrt(3.0 / fin)                 # LeNet.init_weights
        w = jax.random.uniform(k, (fin, fout), jnp.float32, -bound, bound)
        return w, jnp.zeros((fout,), jnp.float32)

    c1w, c1b = conv_params(k1, in_chan, 6)
    c2w, c2b = conv_params(k2, 6, 16)
    f1w, f1b = linear_params(k3, 16 * z * z, 120)
    f2w, f2b = linear_params(k4, 120, 84)
    f3w, f3b = linear_params(k5, 84, out_chan)
    return dict(conv1_w=c1w, conv1_b=c1b, conv2_w=c2w, conv2_b=c2b,
                fc1_w=f1w, fc1_b=f1b, fc2_w=f2w, fc2_b=f2b,
                fc3_w=f3w, fc3_b=f3b)


def pack_params_for_kernel(params, imsize, kernel_size=5):
    """One-time repack: lane-dense Cout (->128), MXU-aligned K (->k*128),
    and the NCHW-flatten permutation folded into fc1's weight."""
    ks = kernel_size
    z = int(0.5 * (0.5 * (imsize - 2) - 2))

    def pack_conv(w_oihw, b):
        cout, cin = w_oihw.shape[0], w_oihw.shape[1]
        k = ks * ks * cin
        kp = _round_up(k, _LANE)
        w = jnp.transpose(w_oihw, (2, 3, 1, 0)).reshape(k, cout)
        w = jnp.pad(w, ((0, kp - k), (0, _LANE - cout)))
        bp = jnp.pad(b, (0, _LANE - cout)).reshape(1, _LANE)
        return w, bp

    def pack_fc(w, b):
        fin, fout = w.shape
        finp, foutp = _round_up(fin, _LANE), _round_up(fout, _LANE)
        wp = jnp.pad(w, ((0, finp - fin), (0, foutp - fout)))
        bp = jnp.pad(b, (0, foutp - fout)).reshape(1, foutp)
        return wp, bp

    c1w, c1b = pack_conv(params["conv1_w"], params["conv1_b"])
    c2w, c2b = pack_conv(params["conv2_w"], params["conv2_b"])

    # fc1: kernel feature order is (h*z + w)*128 + c (spatial-major, padded
    # channels); PyTorch flatten order is c*z*z + h*z + w.  Permute rows once.
    w1, b1 = params["fc1_w"], params["fc1_b"]
    fout1 = w1.shape[1]
    fout1p = _round_up(fout1, _LANE)
    c_real = 16
    hw = jnp.arange(z * z)
    cc = jnp.arange(c_real)
    dst = (hw[:, None] * _LANE + cc[None, :]).reshape(-1)
    src = (cc[None, :] * (z * z) + hw[:, None]).reshape(-1)
    w1c = jnp.pad(w1, ((0, 0), (0, fout1p - fout1)))
    w1p = jnp.zeros((z * z * _LANE, fout1p), jnp.float32).at[dst].set(w1c[src])
    b1p = jnp.pad(b1, (0, fout1p - fout1)).reshape(1, fout1p)

    w2p, b2p = pack_fc(params["fc2_w"], params["fc2_b"])
    w3p, b3p = pack_fc(params["fc3_w"], params["fc3_b"])
    return dict(conv1_w=c1w, conv1_b=c1b, conv2_w=c2w, conv2_b=c2b,
                fc1_w=w1p, fc1_b=b1p, fc2_w=w2p, fc2_b=b2p,
                fc3_w=w3p, fc3_b=b3p)


def lenet_forward(kp, x_nchw, out_chan, kernel_size=5):
    ks = kernel_size
    N = x_nchw.shape[0]
    x = jnp.transpose(x_nchw, (0, 2, 3, 1)).astype(jnp.float32)     # NHWC

    # conv1 + relu + maxpool(2): single fused Pallas kernel
    xp = jnp.pad(x, ((0, 0), (1, 1), (1, 1), (0, 0)))
    p1, (hp1, wp1) = _pool_grouped_patches(xp, ks, kp["conv1_w"].shape[0])
    y1 = conv_relu_pool(p1, kp["conv1_w"], kp["conv1_b"])
    y1 = y1.reshape(N, hp1, wp1, _LANE)[..., :6]                    # real chans

    # conv2 + relu + maxpool(2): single fused Pallas kernel
    yp = jnp.pad(y1, ((0, 0), (1, 1), (1, 1), (0, 0)))
    p2, (hp2, wp2) = _pool_grouped_patches(yp, ks, kp["conv2_w"].shape[0])
    y2 = conv_relu_pool(p2, kp["conv2_w"], kp["conv2_b"])           # (N*z*z,128)

    # Free contiguous reshape; the NCHW-flatten permutation lives in fc1_w.
    feat = y2.reshape(N, hp2 * wp2 * _LANE)
    logits = mlp_head(feat, kp["fc1_w"], kp["fc1_b"],
                      kp["fc2_w"], kp["fc2_b"], kp["fc3_w"], kp["fc3_b"])
    return logits[:, :out_chan]


# ----------------------------------------------------- pure-JAX reference ---

def lenet_reference(params, x_nchw):
    def conv_relu(x, w, b):
        y = jax.lax.conv_general_dilated(
            x, w, window_strides=(1, 1), padding=((1, 1), (1, 1)),
            dimension_numbers=("NCHW", "OIHW", "NCHW"))
        return jax.nn.relu(y + b[None, :, None, None])

    def pool(x):
        N, C, H, W = x.shape
        Hp, Wp = H // 2, W // 2
        return jnp.max(
            x[:, :, :2 * Hp, :2 * Wp].reshape(N, C, Hp, 2, Wp, 2), axis=(3, 5))

    y = pool(conv_relu(x_nchw, params["conv1_w"], params["conv1_b"]))
    y = pool(conv_relu(y, params["conv2_w"], params["conv2_b"]))
    flat = y.reshape(y.shape[0], -1)
    h = jax.nn.relu(flat @ params["fc1_w"] + params["fc1_b"])
    h = jax.nn.relu(h @ params["fc2_w"] + params["fc2_b"])
    return h @ params["fc3_w"] + params["fc3_b"]


# ------------------------------------------------------------------- main ---

if __name__ == "__main__":
    in_chan, out_chan, imsize, batch = 4, 10, 16, 2

    key = jax.random.PRNGKey(0)
    pkey, xkey = jax.random.split(key)
    params = init_lenet_params(pkey, in_chan, out_chan, imsize)
    kparams = pack_params_for_kernel(params, imsize)
    x = jax.random.normal(xkey, (batch, in_chan, imsize, imsize), jnp.float32)

    fwd = jax.jit(lenet_forward, static_argnums=(2,))
    out = jax.block_until_ready(fwd(kparams, x, out_chan))
    assert out.shape == (batch, out_chan), out.shape

    ref = lenet_reference(params, x)
    max_err = float(jnp.max(jnp.abs(out - ref)))
    assert jnp.allclose(out, ref, atol=1e-4, rtol=1e-4), max_err

    print("KERNEL_OK")
</pallas_src>

<mosaic_0001>
module attributes {stable_mosaic.version = 11 : i64} {
  func.func @_conv_pool_kernel(%arg0: i32, %arg1: memref<4x98x128xf32, #tpu.memory_space<vmem>>, %arg2: memref<128x128xf32, #tpu.memory_space<vmem>>, %arg3: memref<1x128xf32, #tpu.memory_space<vmem>>, %arg4: memref<98x128xf32, #tpu.memory_space<vmem>>) attributes {dimension_semantics = [#tpu.dimension_semantics<parallel>], iteration_bounds = array<i64: 1>, scalar_prefetch = 0 : i64, scratch_operands = 0 : i64, tpu.core_type = #tpu.core_type<tc>, window_params = [{transform_indices = @transform_0, window_bounds = array<i64: 4, 98, 128>}, {pipeline_mode = #tpu.pipeline_mode<synchronous>, transform_indices = @transform_1, window_bounds = array<i64: 128, 128>}, {pipeline_mode = #tpu.pipeline_mode<synchronous>, transform_indices = @transform_2, window_bounds = array<i64: 1, 128>}, {transform_indices = @transform_3, window_bounds = array<i64: 98, 128>}]} {
    %c0 = arith.constant 0 : index
    %c0_0 = arith.constant 0 : index
    %0 = vector.load %arg2[%c0, %c0_0] : memref<128x128xf32, #tpu.memory_space<vmem>>, vector<128x128xf32>
    %c0_1 = arith.constant 0 : index
    %c0_2 = arith.constant 0 : index
    %1 = vector.load %arg3[%c0_1, %c0_2] : memref<1x128xf32, #tpu.memory_space<vmem>>, vector<1x128xf32>
    %c0_3 = arith.constant 0 : index
    %c0_4 = arith.constant 0 : index
    %c0_5 = arith.constant 0 : index
    %2 = vector.load %arg1[%c0_3, %c0_4, %c0_5] : memref<4x98x128xf32, #tpu.memory_space<vmem>>, vector<1x98x128xf32>
    %3 = vector.shape_cast %2 : vector<1x98x128xf32> to vector<98x128xf32>
    %cst = arith.constant dense<0.000000e+00> : vector<98x128xf32>
    %4 = tpu.matmul %3, %0, %cst {dimension_numbers = #tpu.dot_dimension_numbers<[1], [0], [0], [1], [0, 0, 1, 1], [], []>} : vector<98x128xf32>, vector<128x128xf32>, vector<98x128xf32> -> vector<98x128xf32>
    %5 = vector.broadcast %1 : vector<1x128xf32> to vector<98x128xf32>
    %6 = arith.addf %4, %5 : vector<98x128xf32>
    %cst_6 = arith.constant 0.000000e+00 : f32
    %7 = vector.broadcast %cst_6 : f32 to vector<98x128xf32>
    %8 = arith.maximumf %6, %7 : vector<98x128xf32>
    %c1 = arith.constant 1 : index
    %c0_7 = arith.constant 0 : index
    %c0_8 = arith.constant 0 : index
    %9 = vector.load %arg1[%c1, %c0_7, %c0_8] : memref<4x98x128xf32, #tpu.memory_space<vmem>>, vector<1x98x128xf32>
    %10 = vector.shape_cast %9 : vector<1x98x128xf32> to vector<98x128xf32>
    %cst_9 = arith.constant dense<0.000000e+00> : vector<98x128xf32>
    %11 = tpu.matmul %10, %0, %cst_9 {dimension_numbers = #tpu.dot_dimension_numbers<[1], [0], [0], [1], [0, 0, 1, 1], [], []>} : vector<98x128xf32>, vector<128x128xf32>, vector<98x128xf32> -> vector<98x128xf32>
    %12 = vector.broadcast %1 : vector<1x128xf32> to vector<98x128xf32>
    %13 = arith.addf %11, %12 : vector<98x128xf32>
    %cst_10 = arith.constant 0.000000e+00 : f32
    %14 = vector.broadcast %cst_10 : f32 to vector<98x128xf32>
    %15 = arith.maximumf %13, %14 : vector<98x128xf32>
    %16 = arith.maximumf %8, %15 : vector<98x128xf32>
    %c2 = arith.constant 2 : index
    %c0_11 = arith.constant 0 : index
    %c0_12 = arith.constant 0 : index
    %17 = vector.load %arg1[%c2, %c0_11, %c0_12] : memref<4x98x128xf32, #tpu.memory_space<vmem>>, vector<1x98x128xf32>
    %18 = vector.shape_cast %17 : vector<1x98x128xf32> to vector<98x128xf32>
    %cst_13 = arith.constant dense<0.000000e+00> : vector<98x128xf32>
    %19 = tpu.matmul %18, %0, %cst_13 {dimension_numbers = #tpu.dot_dimension_numbers<[1], [0], [0], [1], [0, 0, 1, 1], [], []>} : vector<98x128xf32>, vector<128x128xf32>, vector<98x128xf32> -> vector<98x128xf32>
    %20 = vector.broadcast %1 : vector<1x128xf32> to vector<98x128xf32>
    %21 = arith.addf %19, %20 : vector<98x128xf32>
    %cst_14 = arith.constant 0.000000e+00 : f32
    %22 = vector.broadcast %cst_14 : f32 to vector<98x128xf32>
    %23 = arith.maximumf %21, %22 : vector<98x128xf32>
    %24 = arith.maximumf %16, %23 : vector<98x128xf32>
    %c3 = arith.constant 3 : index
    %c0_15 = arith.constant 0 : index
    %c0_16 = arith.constant 0 : index
    %25 = vector.load %arg1[%c3, %c0_15, %c0_16] : memref<4x98x128xf32, #tpu.memory_space<vmem>>, vector<1x98x128xf32>
    %26 = vector.shape_cast %25 : vector<1x98x128xf32> to vector<98x128xf32>
    %cst_17 = arith.constant dense<0.000000e+00> : vector<98x128xf32>
    %27 = tpu.matmul %26, %0, %cst_17 {dimension_numbers = #tpu.dot_dimension_numbers<[1], [0], [0], [1], [0, 0, 1, 1], [], []>} : vector<98x128xf32>, vector<128x128xf32>, vector<98x128xf32> -> vector<98x128xf32>
    %28 = vector.broadcast %1 : vector<1x128xf32> to vector<98x128xf32>
    %29 = arith.addf %27, %28 : vector<98x128xf32>
    %cst_18 = arith.constant 0.000000e+00 : f32
    %30 = vector.broadcast %cst_18 : f32 to vector<98x128xf32>
    %31 = arith.maximumf %29, %30 : vector<98x128xf32>
    %32 = arith.maximumf %24, %31 : vector<98x128xf32>
    %c0_19 = arith.constant 0 : index
    %c0_20 = arith.constant 0 : index
    %33 = vector.load %arg4[%c0_19, %c0_20] : memref<98x128xf32, #tpu.memory_space<vmem>>, vector<98x128xf32>
    tpu.vector_store %arg4[%c0_19, %c0_20], %32 {strides = array<i32>} : memref<98x128xf32, #tpu.memory_space<vmem>>, vector<98x128xf32>,
    return
  }
  func.func @transform_0(%arg0: i32) -> (i32, i32, i32) {
    %c0_i32 = arith.constant 0 : i32
    %c0_i32_0 = arith.constant 0 : i32
    %c0_i32_1 = arith.constant 0 : i32
    return %c0_i32, %arg0, %c0_i32_0 : i32, i32, i32
  }
  func.func @transform_1(%arg0: i32) -> (i32, i32) {
    %c0_i32 = arith.constant 0 : i32
    %c0_i32_0 = arith.constant 0 : i32
    %c0_i32_1 = arith.constant 0 : i32
    return %c0_i32, %c0_i32_0 : i32, i32
  }
  func.func @transform_2(%arg0: i32) -> (i32, i32) {
    %c0_i32 = arith.constant 0 : i32
    %c0_i32_0 = arith.constant 0 : i32
    %c0_i32_1 = arith.constant 0 : i32
    return %c0_i32, %c0_i32_0 : i32, i32
  }
  func.func @transform_3(%arg0: i32) -> (i32, i32) {
    %c0_i32 = arith.constant 0 : i32
    %c0_i32_0 = arith.constant 0 : i32
    return %arg0, %c0_i32 : i32, i32
  }
}

module attributes {stable_mosaic.version = 11 : i64} {
  func.func @_mlp_head_kernel(%arg0: i32, %arg1: memref<2x512xf32, #tpu.memory_space<vmem>>, %arg2: memref<512x128xf32, #tpu.memory_space<vmem>>, %arg3: memref<1x128xf32, #tpu.memory_space<vmem>>, %arg4: memref<128x128xf32, #tpu.memory_space<vmem>>, %arg5: memref<1x128xf32, #tpu.memory_space<vmem>>, %arg6: memref<128x128xf32, #tpu.memory_space<vmem>>, %arg7: memref<1x128xf32, #tpu.memory_space<vmem>>, %arg8: memref<2x128xf32, #tpu.memory_space<vmem>>) attributes {dimension_semantics = [#tpu.dimension_semantics<parallel>], iteration_bounds = array<i64: 1>, scalar_prefetch = 0 : i64, scratch_operands = 0 : i64, tpu.core_type = #tpu.core_type<tc>, window_params = [{transform_indices = @transform_0, window_bounds = array<i64: 2, 512>}, {pipeline_mode = #tpu.pipeline_mode<synchronous>, transform_indices = @transform_1, window_bounds = array<i64: 512, 128>}, {pipeline_mode = #tpu.pipeline_mode<synchronous>, transform_indices = @transform_2, window_bounds = array<i64: 1, 128>}, {pipeline_mode = #tpu.pipeline_mode<synchronous>, transform_indices = @transform_3, window_bounds = array<i64: 128, 128>}, {pipeline_mode = #tpu.pipeline_mode<synchronous>, transform_indices = @transform_4, window_bounds = array<i64: 1, 128>}, {pipeline_mode = #tpu.pipeline_mode<synchronous>, transform_indices = @transform_5, window_bounds = array<i64: 128, 128>}, {pipeline_mode = #tpu.pipeline_mode<synchronous>, transform_indices = @transform_6, window_bounds = array<i64: 1, 128>}, {transform_indices = @transform_7, window_bounds = array<i64: 2, 128>}]} {
    %c0 = arith.constant 0 : index
    %c0_0 = arith.constant 0 : index
    %0 = vector.load %arg1[%c0, %c0_0] : memref<2x512xf32, #tpu.memory_space<vmem>>, vector<2x512xf32>
    %c0_1 = arith.constant 0 : index
    %c0_2 = arith.constant 0 : index
    %1 = vector.load %arg2[%c0_1, %c0_2] : memref<512x128xf32, #tpu.memory_space<vmem>>, vector<512x128xf32>
    %cst = arith.constant dense<0.000000e+00> : vector<2x128xf32>
    %2 = tpu.matmul %0, %1, %cst {dimension_numbers = #tpu.dot_dimension_numbers<[1], [0], [0], [1], [0, 0, 1, 1], [], []>} : vector<2x512xf32>, vector<512x128xf32>, vector<2x128xf32> -> vector<2x128xf32>
    %c0_3 = arith.constant 0 : index
    %c0_4 = arith.constant 0 : index
    %3 = vector.load %arg3[%c0_3, %c0_4] : memref<1x128xf32, #tpu.memory_space<vmem>>, vector<1x128xf32>
    %4 = vector.broadcast %3 : vector<1x128xf32> to vector<2x128xf32>
    %5 = arith.addf %2, %4 : vector<2x128xf32>
    %cst_5 = arith.constant 0.000000e+00 : f32
    %6 = vector.broadcast %cst_5 : f32 to vector<2x128xf32>
    %7 = arith.maximumf %5, %6 : vector<2x128xf32>
    %c0_6 = arith.constant 0 : index
    %c0_7 = arith.constant 0 : index
    %8 = vector.load %arg4[%c0_6, %c0_7] : memref<128x128xf32, #tpu.memory_space<vmem>>, vector<128x128xf32>
    %cst_8 = arith.constant dense<0.000000e+00> : vector<2x128xf32>
    %9 = tpu.matmul %7, %8, %cst_8 {dimension_numbers = #tpu.dot_dimension_numbers<[1], [0], [0], [1], [0, 0, 1, 1], [], []>} : vector<2x128xf32>, vector<128x128xf32>, vector<2x128xf32> -> vector<2x128xf32>
    %c0_9 = arith.constant 0 : index
    %c0_10 = arith.constant 0 : index
    %10 = vector.load %arg5[%c0_9, %c0_10] : memref<1x128xf32, #tpu.memory_space<vmem>>, vector<1x128xf32>
    %11 = vector.broadcast %10 : vector<1x128xf32> to vector<2x128xf32>
    %12 = arith.addf %9, %11 : vector<2x128xf32>
    %cst_11 = arith.constant 0.000000e+00 : f32
    %13 = vector.broadcast %cst_11 : f32 to vector<2x128xf32>
    %14 = arith.maximumf %12, %13 : vector<2x128xf32>
    %c0_12 = arith.constant 0 : index
    %c0_13 = arith.constant 0 : index
    %15 = vector.load %arg6[%c0_12, %c0_13] : memref<128x128xf32, #tpu.memory_space<vmem>>, vector<128x128xf32>
    %cst_14 = arith.constant dense<0.000000e+00> : vector<2x128xf32>
    %16 = tpu.matmul %14, %15, %cst_14 {dimension_numbers = #tpu.dot_dimension_numbers<[1], [0], [0], [1], [0, 0, 1, 1], [], []>} : vector<2x128xf32>, vector<128x128xf32>, vector<2x128xf32> -> vector<2x128xf32>
    %c0_15 = arith.constant 0 : index
    %c0_16 = arith.constant 0 : index
    %17 = vector.load %arg7[%c0_15, %c0_16] : memref<1x128xf32, #tpu.memory_space<vmem>>, vector<1x128xf32>
    %18 = vector.broadcast %17 : vector<1x128xf32> to vector<2x128xf32>
    %19 = arith.addf %16, %18 : vector<2x128xf32>
    %c0_17 = arith.constant 0 : index
    %c0_18 = arith.constant 0 : index
    %20 = vector.load %arg8[%c0_17, %c0_18] : memref<2x128xf32, #tpu.memory_space<vmem>>, vector<2x128xf32>
    tpu.vector_store %arg8[%c0_17, %c0_18], %19 {strides = array<i32>} : memref<2x128xf32, #tpu.memory_space<vmem>>, vector<2x128xf32>,
    return
  }
  func.func @transform_0(%arg0: i32) -> (i32, i32) {
    %c0_i32 = arith.constant 0 : i32
    %c0_i32_0 = arith.constant 0 : i32
    return %arg0, %c0_i32 : i32, i32
  }
  func.func @transform_1(%arg0: i32) -> (i32, i32) {
    %c0_i32 = arith.constant 0 : i32
    %c0_i32_0 = arith.constant 0 : i32
    %c0_i32_1 = arith.constant 0 : i32
    return %c0_i32, %c0_i32_0 : i32, i32
  }
  func.func @transform_2(%arg0: i32) -> (i32, i32) {
    %c0_i32 = arith.constant 0 : i32
    %c0_i32_0 = arith.constant 0 : i32
    %c0_i32_1 = arith.constant 0 : i32
    return %c0_i32, %c0_i32_0 : i32, i32
  }
  func.func @transform_3(%arg0: i32) -> (i32, i32) {
    %c0_i32 = arith.constant 0 : i32
    %c0_i32_0 = arith.constant 0 : i32
    %c0_i32_1 = arith.constant 0 : i32
    return %c0_i32, %c0_i32_0 : i32, i32
  }
  func.func @transform_4(%arg0: i32) -> (i32, i32) {
    %c0_i32 = arith.constant 0 : i32
    %c0_i32_0 = arith.constant 0 : i32
    %c0_i32_1 = arith.constant 0 : i32
    return %c0_i32, %c0_i32_0 : i32, i32
  }
  func.func @transform_5(%arg0: i32) -> (i32, i32) {
    %c0_i32 = arith.constant 0 : i32
    %c0_i32_0 = arith.constant 0 : i32
    %c0_i32_1 = arith.constant 0 : i32
    return %c0_i32, %c0_i32_0 : i32, i32
  }
  func.func @transform_6(%arg0: i32) -> (i32, i32) {
    %c0_i32 = arith.constant 0 : i32
    %c0_i32_0 = arith.constant 0 : i32
    %c0_i32_1 = arith.constant 0 : i32
    return %c0_i32, %c0_i32_0 : i32, i32
  }
  func.func @transform_7(%arg0: i32) -> (i32, i32) {
    %c0_i32 = arith.constant 0 : i32
    %c0_i32_0 = arith.constant 0 : i32
    return %arg0, %c0_i32 : i32, i32
  }
}

module attributes {stable_mosaic.version = 11 : i64} {
  func.func @_conv_pool_kernel(%arg0: i32, %arg1: memref<4x8x256xf32, #tpu.memory_space<vmem>>, %arg2: memref<256x128xf32, #tpu.memory_space<vmem>>, %arg3: memref<1x128xf32, #tpu.memory_space<vmem>>, %arg4: memref<8x128xf32, #tpu.memory_space<vmem>>) attributes {dimension_semantics = [#tpu.dimension_semantics<parallel>], iteration_bounds = array<i64: 1>, scalar_prefetch = 0 : i64, scratch_operands = 0 : i64, tpu.core_type = #tpu.core_type<tc>, window_params = [{transform_indices = @transform_0, window_bounds = array<i64: 4, 8, 256>}, {pipeline_mode = #tpu.pipeline_mode<synchronous>, transform_indices = @transform_1, window_bounds = array<i64: 256, 128>}, {pipeline_mode = #tpu.pipeline_mode<synchronous>, transform_indices = @transform_2, window_bounds = array<i64: 1, 128>}, {transform_indices = @transform_3, window_bounds = array<i64: 8, 128>}]} {
    %c0 = arith.constant 0 : index
    %c0_0 = arith.constant 0 : index
    %0 = vector.load %arg2[%c0, %c0_0] : memref<256x128xf32, #tpu.memory_space<vmem>>, vector<256x128xf32>
    %c0_1 = arith.constant 0 : index
    %c0_2 = arith.constant 0 : index
    %1 = vector.load %arg3[%c0_1, %c0_2] : memref<1x128xf32, #tpu.memory_space<vmem>>, vector<1x128xf32>
    %c0_3 = arith.constant 0 : index
    %c0_4 = arith.constant 0 : index
    %c0_5 = arith.constant 0 : index
    %2 = vector.load %arg1[%c0_3, %c0_4, %c0_5] : memref<4x8x256xf32, #tpu.memory_space<vmem>>, vector<1x8x256xf32>
    %3 = vector.shape_cast %2 : vector<1x8x256xf32> to vector<8x256xf32>
    %cst = arith.constant dense<0.000000e+00> : vector<8x128xf32>
    %4 = tpu.matmul %3, %0, %cst {dimension_numbers = #tpu.dot_dimension_numbers<[1], [0], [0], [1], [0, 0, 1, 1], [], []>} : vector<8x256xf32>, vector<256x128xf32>, vector<8x128xf32> -> vector<8x128xf32>
    %5 = vector.broadcast %1 : vector<1x128xf32> to vector<8x128xf32>
    %6 = arith.addf %4, %5 : vector<8x128xf32>
    %cst_6 = arith.constant 0.000000e+00 : f32
    %7 = vector.broadcast %cst_6 : f32 to vector<8x128xf32>
    %8 = arith.maximumf %6, %7 : vector<8x128xf32>
    %c1 = arith.constant 1 : index
    %c0_7 = arith.constant 0 : index
    %c0_8 = arith.constant 0 : index
    %9 = vector.load %arg1[%c1, %c0_7, %c0_8] : memref<4x8x256xf32, #tpu.memory_space<vmem>>, vector<1x8x256xf32>
    %10 = vector.shape_cast %9 : vector<1x8x256xf32> to vector<8x256xf32>
    %cst_9 = arith.constant dense<0.000000e+00> : vector<8x128xf32>
    %11 = tpu.matmul %10, %0, %cst_9 {dimension_numbers = #tpu.dot_dimension_numbers<[1], [0], [0], [1], [0, 0, 1, 1], [], []>} : vector<8x256xf32>, vector<256x128xf32>, vector<8x128xf32> -> vector<8x128xf32>
    %12 = vector.broadcast %1 : vector<1x128xf32> to vector<8x128xf32>
    %13 = arith.addf %11, %12 : vector<8x128xf32>
    %cst_10 = arith.constant 0.000000e+00 : f32
    %14 = vector.broadcast %cst_10 : f32 to vector<8x128xf32>
    %15 = arith.maximumf %13, %14 : vector<8x128xf32>
    %16 = arith.maximumf %8, %15 : vector<8x128xf32>
    %c2 = arith.constant 2 : index
    %c0_11 = arith.constant 0 : index
    %c0_12 = arith.constant 0 : index
    %17 = vector.load %arg1[%c2, %c0_11, %c0_12] : memref<4x8x256xf32, #tpu.memory_space<vmem>>, vector<1x8x256xf32>
    %18 = vector.shape_cast %17 : vector<1x8x256xf32> to vector<8x256xf32>
    %cst_13 = arith.constant dense<0.000000e+00> : vector<8x128xf32>
    %19 = tpu.matmul %18, %0, %cst_13 {dimension_numbers = #tpu.dot_dimension_numbers<[1], [0], [0], [1], [0, 0, 1, 1], [], []>} : vector<8x256xf32>, vector<256x128xf32>, vector<8x128xf32> -> vector<8x128xf32>
    %20 = vector.broadcast %1 : vector<1x128xf32> to vector<8x128xf32>
    %21 = arith.addf %19, %20 : vector<8x128xf32>
    %cst_14 = arith.constant 0.000000e+00 : f32
    %22 = vector.broadcast %cst_14 : f32 to vector<8x128xf32>
    %23 = arith.maximumf %21, %22 : vector<8x128xf32>
    %24 = arith.maximumf %16, %23 : vector<8x128xf32>
    %c3 = arith.constant 3 : index
    %c0_15 = arith.constant 0 : index
    %c0_16 = arith.constant 0 : index
    %25 = vector.load %arg1[%c3, %c0_15, %c0_16] : memref<4x8x256xf32, #tpu.memory_space<vmem>>, vector<1x8x256xf32>
    %26 = vector.shape_cast %25 : vector<1x8x256xf32> to vector<8x256xf32>
    %cst_17 = arith.constant dense<0.000000e+00> : vector<8x128xf32>
    %27 = tpu.matmul %26, %0, %cst_17 {dimension_numbers = #tpu.dot_dimension_numbers<[1], [0], [0], [1], [0, 0, 1, 1], [], []>} : vector<8x256xf32>, vector<256x128xf32>, vector<8x128xf32> -> vector<8x128xf32>
    %28 = vector.broadcast %1 : vector<1x128xf32> to vector<8x128xf32>
    %29 = arith.addf %27, %28 : vector<8x128xf32>
    %cst_18 = arith.constant 0.000000e+00 : f32
    %30 = vector.broadcast %cst_18 : f32 to vector<8x128xf32>
    %31 = arith.maximumf %29, %30 : vector<8x128xf32>
    %32 = arith.maximumf %24, %31 : vector<8x128xf32>
    %c0_19 = arith.constant 0 : index
    %c0_20 = arith.constant 0 : index
    %33 = vector.load %arg4[%c0_19, %c0_20] : memref<8x128xf32, #tpu.memory_space<vmem>>, vector<8x128xf32>
    tpu.vector_store %arg4[%c0_19, %c0_20], %32 {strides = array<i32>} : memref<8x128xf32, #tpu.memory_space<vmem>>, vector<8x128xf32>,
    return
  }
  func.func @transform_0(%arg0: i32) -> (i32, i32, i32) {
    %c0_i32 = arith.constant 0 : i32
    %c0_i32_0 = arith.constant 0 : i32
    %c0_i32_1 = arith.constant 0 : i32
    return %c0_i32, %arg0, %c0_i32_0 : i32, i32, i32
  }
  func.func @transform_1(%arg0: i32) -> (i32, i32) {
    %c0_i32 = arith.constant 0 : i32
    %c0_i32_0 = arith.constant 0 : i32
    %c0_i32_1 = arith.constant 0 : i32
    return %c0_i32, %c0_i32_0 : i32, i32
  }
  func.func @transform_2(%arg0: i32) -> (i32, i32) {
    %c0_i32 = arith.constant 0 : i32
    %c0_i32_0 = arith.constant 0 : i32
    %c0_i32_1 = arith.constant 0 : i32
    return %c0_i32, %c0_i32_0 : i32, i32
  }
  func.func @transform_3(%arg0: i32) -> (i32, i32) {
    %c0_i32 = arith.constant 0 : i32
    %c0_i32_0 = arith.constant 0 : i32
    return %arg0, %c0_i32 : i32, i32
  }
}

</mosaic_0001>

<llo_original>
// kernel: lenet_forward.3
$region0: #{lenet_forward.3}
  #allocation0 [shape = 'u32[]', space=smem, size = 0x4, offset = 0x4, fixed_abs, tag = 'smem constant byte address 0x4 - core index']
  #allocation1 [shape = 'u32[144,128]{1,0:T(1,128)}', space=vmem, size = 0x12000, scoped, tag = 'internal scratch']
  %s0 = inlined_call_operand.vmem [shape: f32[4,98,128], index: 0, kind: input, shape index: {}]
  %s1 = inlined_call_operand.vmem [shape: f32[128,128], index: 1, kind: input, shape index: {}]
  %s2 = inlined_call_operand.vmem [shape: f32[1,128], index: 2, kind: input, shape index: {}]
  %s3 = inlined_call_operand.vmem [shape: f32[98,128], index: 3, kind: output, shape index: {}]
  %s4 = sld [smem:[#allocation0]]
  $region22: #{lenet_forward.3} parent=0
    _
  %s6 = ssub.s32 1, %s4
  %s7 = scalar_select 0, %s6, %s4
  // Predicated region
  $region2: #{lenet_forward.3} parent=0 // pred_check
    _
  $region3: #{lenet_forward.3} parent=0 // pred_check_branch
    %9 = sbr.rel (0) target = $region5
  $region4: #{lenet_forward.3} parent=0 // pred_region
    _
  $region5: #{lenet_forward.3} parent=0 // pred_fallthru
    _
  // Predicated region
  $region6: #{lenet_forward.3} parent=0 // pred_check
    _
  $region7: #{lenet_forward.3} parent=0 // pred_check_branch
    %11 = sbr.rel (0) target = $region9
  $region8: #{lenet_forward.3} parent=0 // pred_region
    _
  $region9: #{lenet_forward.3} parent=0 // pred_fallthru
    _
  // Predicated region
  $region10: #{lenet_forward.3} parent=0 // pred_check
    _
  $region11: #{lenet_forward.3} parent=0 // pred_check_branch
    %13 = sbr.rel (0) target = $region13
  $region12: #{lenet_forward.3} parent=0 // pred_region
    _
  $region13: #{lenet_forward.3} parent=0 // pred_fallthru
    _
  %v14 = vld [vmem:[%s1] sm:$0xff]
  %v15 = vld [vmem:[%s1 + $0x8] sm:$0xff]
  %v16 = vld [vmem:[%s1 + $0x10] sm:$0xff]
  %v17 = vld [vmem:[%s1 + $0x18] sm:$0xff]
  %v18 = vld [vmem:[%s1 + $0x20] sm:$0xff]
  %v19 = vld [vmem:[%s1 + $0x28] sm:$0xff]
  %v20 = vld [vmem:[%s1 + $0x30] sm:$0xff]
  %v21 = vld [vmem:[%s1 + $0x38] sm:$0xff]
  %v22 = vld [vmem:[%s1 + $0x40] sm:$0xff]
  %v23 = vld [vmem:[%s1 + $0x48] sm:$0xff]
  %v24 = vld [vmem:[%s1 + $0x50] sm:$0xff]
  %v25 = vld [vmem:[%s1 + $0x58] sm:$0xff]
  %v26 = vld [vmem:[%s1 + $0x60] sm:$0xff]
  %v27 = vld [vmem:[%s1 + $0x68] sm:$0xff]
  %v28 = vld [vmem:[%s1 + $0x70] sm:$0xff]
  %v29 = vld [vmem:[%s1 + $0x78] sm:$0xff]
  %v30 = vld [vmem:[%s2] sm:$0x1]
  %v31 = vld [vmem:[%s0] sm:$0xff]
  %v32 = vld [vmem:[%s0 + $0x8] sm:$0xff]
  %v33 = vld [vmem:[%s0 + $0x10] sm:$0xff]
  %v34 = vld [vmem:[%s0 + $0x18] sm:$0xff]
  %v35 = vld [vmem:[%s0 + $0x20] sm:$0xff]
  %v36 = vld [vmem:[%s0 + $0x28] sm:$0xff]
  %v37 = vld [vmem:[%s0 + $0x30] sm:$0xff]
  %v38 = vld [vmem:[%s0 + $0x38] sm:$0xff]
  %v39 = vld [vmem:[%s0 + $0x40] sm:$0xff]
  %v40 = vld [vmem:[%s0 + $0x48] sm:$0xff]
  %v41 = vld [vmem:[%s0 + $0x50] sm:$0xff]
  %v42 = vld [vmem:[%s0 + $0x58] sm:$0xff]
  %v43 = vld [vmem:[%s0 + $0x60] sm:$0x3]
  %v45 = vlaneseq
  %v46 = vshrl.u32 %v45, 7
  %v47 = vsub.s32 0, %v46
  %v48 = vrot.slane %v30, %v47
  %50 = vmatprep.subr.mxu0 0.0
  %51 = vmatpush1.msra.mxu0 %v29
  %52 = vmatprep.subr.mxu0 0.0
  %53 = vmatpush1.msra.mxu0 %v28
  %54 = vmatprep.subr.mxu0 0.0
  %55 = vmatpush1.msra.mxu0 %v27
  %56 = vmatprep.subr.mxu0 0.0
  %57 = vmatpush1.msra.mxu0 %v26
  %58 = vmatprep.subr.mxu0 0.0
  %59 = vmatpush1.msra.mxu0 %v25
  %60 = vmatprep.subr.mxu0 0.0
  %61 = vmatpush1.msra.mxu0 %v24
  %62 = vmatprep.subr.mxu0 0.0
  %63 = vmatpush1.msra.mxu0 %v23
  %64 = vmatprep.subr.mxu0 0.0
  %65 = vmatpush1.msra.mxu0 %v22
  %66 = vmatprep.subr.mxu0 0.0
  %67 = vmatpush1.msra.mxu0 %v21
  %68 = vmatprep.subr.mxu0 0.0
  %69 = vmatpush1.msra.mxu0 %v20
  %70 = vmatprep.subr.mxu0 0.0
  %71 = vmatpush1.msra.mxu0 %v19
  %72 = vmatprep.subr.mxu0 0.0
  %73 = vmatpush1.msra.mxu0 %v18
  %74 = vmatprep.subr.mxu0 0.0
  %75 = vmatpush1.msra.mxu0 %v17
  %76 = vmatprep.subr.mxu0 0.0
  %77 = vmatpush1.msra.mxu0 %v16
  %78 = vmatprep.subr.mxu0 0.0
  %79 = vmatpush1.msra.mxu0 %v15
  %80 = vmatprep.subr.mxu0 0.0
  %81 = vmatpush1.msra.mxu0 %v14
  %82 = vmatprep.subr.mxu0 0.0
  %83 = vmatpush2.msra.mxu0 0.0
  %84 = vmatprep.subr.mxu0 0.0
  %85 = vmatpush2.msra.mxu0 0.0
  %86 = vmatprep.subr.mxu0 0.0
  %87 = vmatpush2.msra.mxu0 0.0
  %88 = vmatprep.subr.mxu0 0.0
  %89 = vmatpush2.msra.mxu0 0.0
  %90 = vmatprep.subr.mxu0 0.0
  %91 = vmatpush2.msra.mxu0 0.0
  %92 = vmatprep.subr.mxu0 0.0
  %93 = vmatpush2.msra.mxu0 0.0
  %94 = vmatprep.subr.mxu0 0.0
  %95 = vmatpush2.msra.mxu0 0.0
  %96 = vmatprep.subr.mxu0 0.0
  %97 = vmatpush2.msra.mxu0 0.0
  %98 = vmatprep.subr.mxu0 0.0
  %99 = vmatpush2.msra.mxu0 0.0
  %100 = vmatprep.subr.mxu0 0.0
  %101 = vmatpush2.msra.mxu0 0.0
  %102 = vmatprep.subr.mxu0 0.0
  %103 = vmatpush2.msra.mxu0 0.0
  %104 = vmatprep.subr.mxu0 0.0
  %105 = vmatpush2.msra.mxu0 0.0
  %106 = vmatprep.subr.mxu0 0.0
  %107 = vmatpush2.msra.mxu0 0.0
  %108 = vmatprep.subr.mxu0 0.0
  %109 = vmatpush2.msra.mxu0 0.0
  %110 = vmatprep.subr.mxu0 0.0
  %111 = vmatpush2.msra.mxu0 0.0
  %112 = vmatprep.subr.mxu0 0.0
  %113 = vmatpush2.msra.mxu0 0.0
  %114 = vmatprep.mubr.f32.mxu0 0.0
  %115 = vmatmul.mubr.f32.gmra.mxu0 %v31
  %v116 = vpop.f32.mrf.mxu0
  %v117 = vadd.f32 %v48, %v116
  %v118 = vpop.f32.mrf.mxu0
  %119 = vmatprep.mubr.f32.mxu0 0.0
  %120 = vmatmul.mubr.f32.gmra.mxu0 %v32
  %v121 = vpop.f32.mrf.mxu0
  %v122 = vadd.f32 %v48, %v121
  %v123 = vpop.f32.mrf.mxu0
  %124 = vmatprep.mubr.f32.mxu0 0.0
  %125 = vmatmul.mubr.f32.gmra.mxu0 %v33
  %v126 = vpop.f32.mrf.mxu0
  %v127 = vadd.f32 %v48, %v126
  %v128 = vpop.f32.mrf.mxu0
  %129 = vmatprep.mubr.f32.mxu0 0.0
  %130 = vmatmul.mubr.f32.gmra.mxu0 %v34
  %v131 = vpop.f32.mrf.mxu0
  %v132 = vadd.f32 %v48, %v131
  %v133 = vpop.f32.mrf.mxu0
  %134 = vmatprep.mubr.f32.mxu0 0.0
  %135 = vmatmul.mubr.f32.gmra.mxu0 %v35
  %v136 = vpop.f32.mrf.mxu0
  %v137 = vadd.f32 %v48, %v136
  %v138 = vpop.f32.mrf.mxu0
  %139 = vmatprep.mubr.f32.mxu0 0.0
  %140 = vmatmul.mubr.f32.gmra.mxu0 %v36
  %v141 = vpop.f32.mrf.mxu0
  %v142 = vadd.f32 %v48, %v141
  %v143 = vpop.f32.mrf.mxu0
  %144 = vmatprep.mubr.f32.mxu0 0.0
  %145 = vmatmul.mubr.f32.gmra.mxu0 %v37
  %v146 = vpop.f32.mrf.mxu0
  %v147 = vadd.f32 %v48, %v146
  %v148 = vpop.f32.mrf.mxu0
  %149 = vmatprep.mubr.f32.mxu0 0.0
  %150 = vmatmul.mubr.f32.gmra.mxu0 %v38
  %v151 = vpop.f32.mrf.mxu0
  %v152 = vadd.f32 %v48, %v151
  %v153 = vpop.f32.mrf.mxu0
  %154 = vmatprep.mubr.f32.mxu0 0.0
  %155 = vmatmul.mubr.f32.gmra.mxu0 %v39
  %v156 = vpop.f32.mrf.mxu0
  %v157 = vadd.f32 %v48, %v156
  %v158 = vpop.f32.mrf.mxu0
  %159 = vmatprep.mubr.f32.mxu0 0.0
  %160 = vmatmul.mubr.f32.gmra.mxu0 %v40
  %v161 = vpop.f32.mrf.mxu0
  %v162 = vadd.f32 %v48, %v161
  %v163 = vpop.f32.mrf.mxu0
  %164 = vmatprep.mubr.f32.mxu0 0.0
  %165 = vmatmul.mubr.f32.gmra.mxu0 %v41
  %v166 = vpop.f32.mrf.mxu0
  %v167 = vadd.f32 %v48, %v166
  %v168 = vpop.f32.mrf.mxu0
  %169 = vmatprep.mubr.f32.mxu0 0.0
  %170 = vmatmul.mubr.f32.gmra.mxu0 %v42
  %v171 = vpop.f32.mrf.mxu0
  %v172 = vadd.f32 %v48, %v171
  %v173 = vpop.f32.mrf.mxu0
  %174 = vmatprep.mubr.f32.mxu0 0.0
  %175 = vmatmul.mubr.f32.gmra.mxu0 %v43
  %v176 = vpop.f32.mrf.mxu0
  %v177 = vadd.f32 %v48, %v176
  %v178 = vpop.f32.mrf.mxu0
  %179 = vdwg.mxu0
  %v180 = vmax.f32 %v117, 0.0
  %v181 = vmax.f32 %v122, 0.0
  %v182 = vmax.f32 %v127, 0.0
  %v183 = vmax.f32 %v132, 0.0
  %v184 = vmax.f32 %v137, 0.0
  %v185 = vmax.f32 %v142, 0.0
  %v186 = vmax.f32 %v147, 0.0
  %v187 = vmax.f32 %v152, 0.0
  %v188 = vmax.f32 %v157, 0.0
  %v189 = vmax.f32 %v162, 0.0
  %v190 = vmax.f32 %v167, 0.0
  %v191 = vmax.f32 %v172, 0.0
  %v192 = vmax.f32 %v177, 0.0
  %s193 = scalar_lea.vmem %s0, 104
  %v194 = vld [vmem:[%s193] sm:$0xff]
  %v195 = vld [vmem:[%s193 + $0x8] sm:$0xff]
  %v196 = vld [vmem:[%s193 + $0x10] sm:$0xff]
  %v197 = vld [vmem:[%s193 + $0x18] sm:$0xff]
  %v198 = vld [vmem:[%s193 + $0x20] sm:$0xff]
  %v199 = vld [vmem:[%s193 + $0x28] sm:$0xff]
  %v200 = vld [vmem:[%s193 + $0x30] sm:$0xff]
  %v201 = vld [vmem:[%s193 + $0x38] sm:$0xff]
  %v202 = vld [vmem:[%s193 + $0x40] sm:$0xff]
  %v203 = vld [vmem:[%s193 + $0x48] sm:$0xff]
  %v204 = vld [vmem:[%s193 + $0x50] sm:$0xff]
  %v205 = vld [vmem:[%s193 + $0x58] sm:$0xff]
  %v206 = vld [vmem:[%s193 + $0x60] sm:$0x3]
  %207 = vmatprep.subr.mxu0 0.0
  %208 = vmatpush1.msra.mxu0 %v29
  %209 = vmatprep.subr.mxu0 0.0
  %210 = vmatpush1.msra.mxu0 %v28
  %211 = vmatprep.subr.mxu0 0.0
  %212 = vmatpush1.msra.mxu0 %v27
  %213 = vmatprep.subr.mxu0 0.0
  %214 = vmatpush1.msra.mxu0 %v26
  %215 = vmatprep.subr.mxu0 0.0
  %216 = vmatpush1.msra.mxu0 %v25
  %217 = vmatprep.subr.mxu0 0.0
  %218 = vmatpush1.msra.mxu0 %v24
  %219 = vmatprep.subr.mxu0 0.0
  %220 = vmatpush1.msra.mxu0 %v23
  %221 = vmatprep.subr.mxu0 0.0
  %222 = vmatpush1.msra.mxu0 %v22
  %223 = vmatprep.subr.mxu0 0.0
  %224 = vmatpush1.msra.mxu0 %v21
  %225 = vmatprep.subr.mxu0 0.0
  %226 = vmatpush1.msra.mxu0 %v20
  %227 = vmatprep.subr.mxu0 0.0
  %228 = vmatpush1.msra.mxu0 %v19
  %229 = vmatprep.subr.mxu0 0.0
  %230 = vmatpush1.msra.mxu0 %v18
  %231 = vmatprep.subr.mxu0 0.0
  %232 = vmatpush1.msra.mxu0 %v17
  %233 = vmatprep.subr.mxu0 0.0
  %234 = vmatpush1.msra.mxu0 %v16
  %235 = vmatprep.subr.mxu0 0.0
  %236 = vmatpush1.msra.mxu0 %v15
  %237 = vmatprep.subr.mxu0 0.0
  %238 = vmatpush1.msra.mxu0 %v14
  %239 = vmatprep.subr.mxu0 0.0
  %240 = vmatpush2.msra.mxu0 0.0
  %241 = vmatprep.subr.mxu0 0.0
  %242 = vmatpush2.msra.mxu0 0.0
  %243 = vmatprep.subr.mxu0 0.0
  %244 = vmatpush2.msra.mxu0 0.0
  %245 = vmatprep.subr.mxu0 0.0
  %246 = vmatpush2.msra.mxu0 0.0
  %247 = vmatprep.subr.mxu0 0.0
  %248 = vmatpush2.msra.mxu0 0.0
  %249 = vmatprep.subr.mxu0 0.0
  %250 = vmatpush2.msra.mxu0 0.0
  %251 = vmatprep.subr.mxu0 0.0
  %252 = vmatpush2.msra.mxu0 0.0
  %253 = vmatprep.subr.mxu0 0.0
  %254 = vmatpush2.msra.mxu0 0.0
  %255 = vmatprep.subr.mxu0 0.0
  %256 = vmatpush2.msra.mxu0 0.0
  %257 = vmatprep.subr.mxu0 0.0
  %258 = vmatpush2.msra.mxu0 0.0
  %259 = vmatprep.subr.mxu0 0.0
  %260 = vmatpush2.msra.mxu0 0.0
  %261 = vmatprep.subr.mxu0 0.0
  %262 = vmatpush2.msra.mxu0 0.0
  %263 = vmatprep.subr.mxu0 0.0
  %264 = vmatpush2.msra.mxu0 0.0
  %265 = vmatprep.subr.mxu0 0.0
  %266 = vmatpush2.msra.mxu0 0.0
  %267 = vmatprep.subr.mxu0 0.0
  %268 = vmatpush2.msra.mxu0 0.0
  %269 = vmatprep.subr.mxu0 0.0
  %270 = vmatpush2.msra.mxu0 0.0
  %271 = vmatprep.mubr.f32.mxu0 0.0
  %272 = vmatmul.mubr.f32.gmra.mxu0 %v194
  %v273 = vpop.f32.mrf.mxu0
  %v274 = vadd.f32 %v48, %v273
  %v275 = vpop.f32.mrf.mxu0
  %276 = vmatprep.mubr.f32.mxu0 0.0
  %277 = vmatmul.mubr.f32.gmra.mxu0 %v195
  %v278 = vpop.f32.mrf.mxu0
  %v279 = vadd.f32 %v48, %v278
  %v280 = vpop.f32.mrf.mxu0
  %281 = vmatprep.mubr.f32.mxu0 0.0
  %282 = vmatmul.mubr.f32.gmra.mxu0 %v196
  %v283 = vpop.f32.mrf.mxu0
  %v284 = vadd.f32 %v48, %v283
  %v285 = vpop.f32.mrf.mxu0
  %286 = vmatprep.mubr.f32.mxu0 0.0
  %287 = vmatmul.mubr.f32.gmra.mxu0 %v197
  %v288 = vpop.f32.mrf.mxu0
  %v289 = vadd.f32 %v48, %v288
  %v290 = vpop.f32.mrf.mxu0
  %291 = vmatprep.mubr.f32.mxu0 0.0
  %292 = vmatmul.mubr.f32.gmra.mxu0 %v198
  %v293 = vpop.f32.mrf.mxu0
  %v294 = vadd.f32 %v48, %v293
  %v295 = vpop.f32.mrf.mxu0
  %296 = vmatprep.mubr.f32.mxu0 0.0
  %297 = vmatmul.mubr.f32.gmra.mxu0 %v199
  %v298 = vpop.f32.mrf.mxu0
  %v299 = vadd.f32 %v48, %v298
  %v300 = vpop.f32.mrf.mxu0
  %301 = vmatprep.mubr.f32.mxu0 0.0
  %302 = vmatmul.mubr.f32.gmra.mxu0 %v200
  %v303 = vpop.f32.mrf.mxu0
  %v304 = vadd.f32 %v48, %v303
  %v305 = vpop.f32.mrf.mxu0
  %306 = vmatprep.mubr.f32.mxu0 0.0
  %307 = vmatmul.mubr.f32.gmra.mxu0 %v201
  %v308 = vpop.f32.mrf.mxu0
  %v309 = vadd.f32 %v48, %v308
  %v310 = vpop.f32.mrf.mxu0
  %311 = vmatprep.mubr.f32.mxu0 0.0
  %312 = vmatmul.mubr.f32.gmra.mxu0 %v202
  %v313 = vpop.f32.mrf.mxu0
  %v314 = vadd.f32 %v48, %v313
  %v315 = vpop.f32.mrf.mxu0
  %316 = vmatprep.mubr.f32.mxu0 0.0
  %317 = vmatmul.mubr.f32.gmra.mxu0 %v203
  %v318 = vpop.f32.mrf.mxu0
  %v319 = vadd.f32 %v48, %v318
  %v320 = vpop.f32.mrf.mxu0
  %321 = vmatprep.mubr.f32.mxu0 0.0
  %322 = vmatmul.mubr.f32.gmra.mxu0 %v204
  %v323 = vpop.f32.mrf.mxu0
  %v324 = vadd.f32 %v48, %v323
  %v325 = vpop.f32.mrf.mxu0
  %326 = vmatprep.mubr.f32.mxu0 0.0
  %327 = vmatmul.mubr.f32.gmra.mxu0 %v205
  %v328 = vpop.f32.mrf.mxu0
  %v329 = vadd.f32 %v48, %v328
  %v330 = vpop.f32.mrf.mxu0
  %331 = vmatprep.mubr.f32.mxu0 0.0
  %332 = vmatmul.mubr.f32.gmra.mxu0 %v206
  %v333 = vpop.f32.mrf.mxu0
  %v334 = vadd.f32 %v48, %v333
  %v335 = vpop.f32.mrf.mxu0
  %336 = vdwg.mxu0
  %v337 = vmax.f32 %v274, 0.0
  %v338 = vmax.f32 %v279, 0.0
  %v339 = vmax.f32 %v284, 0.0
  %v340 = vmax.f32 %v289, 0.0
  %v341 = vmax.f32 %v294, 0.0
  %v342 = vmax.f32 %v299, 0.0
  %v343 = vmax.f32 %v304, 0.0
  %v344 = vmax.f32 %v309, 0.0
  %v345 = vmax.f32 %v314, 0.0
  %v346 = vmax.f32 %v319, 0.0
  %v347 = vmax.f32 %v324, 0.0
  %v348 = vmax.f32 %v329, 0.0
  %v349 = vmax.f32 %v334, 0.0
  %v350 = vmax.f32 %v180, %v337
  %v351 = vmax.f32 %v181, %v338
  %v352 = vmax.f32 %v182, %v339
  %v353 = vmax.f32 %v183, %v340
  %v354 = vmax.f32 %v184, %v341
  %v355 = vmax.f32 %v185, %v342
  %v356 = vmax.f32 %v186, %v343
  %v357 = vmax.f32 %v187, %v344
  %v358 = vmax.f32 %v188, %v345
  %v359 = vmax.f32 %v189, %v346
  %v360 = vmax.f32 %v190, %v347
  %v361 = vmax.f32 %v191, %v348
  %v362 = vmax.f32 %v192, %v349
  %s363 = scalar_lea.vmem %s0, 208
  %v364 = vld [vmem:[%s363] sm:$0xff]
  %v365 = vld [vmem:[%s363 + $0x8] sm:$0xff]
  %v366 = vld [vmem:[%s363 + $0x10] sm:$0xff]
  %v367 = vld [vmem:[%s363 + $0x18] sm:$0xff]
  %v368 = vld [vmem:[%s363 + $0x20] sm:$0xff]
  %v369 = vld [vmem:[%s363 + $0x28] sm:$0xff]
  %v370 = vld [vmem:[%s363 + $0x30] sm:$0xff]
  %v371 = vld [vmem:[%s363 + $0x38] sm:$0xff]
  %v372 = vld [vmem:[%s363 + $0x40] sm:$0xff]
  %v373 = vld [vmem:[%s363 + $0x48] sm:$0xff]
  %v374 = vld [vmem:[%s363 + $0x50] sm:$0xff]
  %v375 = vld [vmem:[%s363 + $0x58] sm:$0xff]
  %v376 = vld [vmem:[%s363 + $0x60] sm:$0x3]
  %377 = vmatprep.subr.mxu0 0.0
  %378 = vmatpush1.msra.mxu0 %v29
  %379 = vmatprep.subr.mxu0 0.0
  %380 = vmatpush1.msra.mxu0 %v28
  %381 = vmatprep.subr.mxu0 0.0
  %382 = vmatpush1.msra.mxu0 %v27
  %383 = vmatprep.subr.mxu0 0.0
  %384 = vmatpush1.msra.mxu0 %v26
  %385 = vmatprep.subr.mxu0 0.0
  %386 = vmatpush1.msra.mxu0 %v25
  %387 = vmatprep.subr.mxu0 0.0
  %388 = vmatpush1.msra.mxu0 %v24
  %389 = vmatprep.subr.mxu0 0.0
  %390 = vmatpush1.msra.mxu0 %v23
  %391 = vmatprep.subr.mxu0 0.0
  %392 = vmatpush1.msra.mxu0 %v22
  %393 = vmatprep.subr.mxu0 0.0
  %394 = vmatpush1.msra.mxu0 %v21
  %395 = vmatprep.subr.mxu0 0.0
  %396 = vmatpush1.msra.mxu0 %v20
  %397 = vmatprep.subr.mxu0 0.0
  %398 = vmatpush1.msra.mxu0 %v19
  %399 = vmatprep.subr.mxu0 0.0
  %400 = vmatpush1.msra.mxu0 %v18
  %401 = vmatprep.subr.mxu0 0.0
  %402 = vmatpush1.msra.mxu0 %v17
  %403 = vmatprep.subr.mxu0 0.0
  %404 = vmatpush1.msra.mxu0 %v16
  %405 = vmatprep.subr.mxu0 0.0
  %406 = vmatpush1.msra.mxu0 %v15
  %407 = vmatprep.subr.mxu0 0.0
  %408 = vmatpush1.msra.mxu0 %v14
  %409 = vmatprep.subr.mxu0 0.0
  %410 = vmatpush2.msra.mxu0 0.0
  %411 = vmatprep.subr.mxu0 0.0
  %412 = vmatpush2.msra.mxu0 0.0
  %413 = vmatprep.subr.mxu0 0.0
  %414 = vmatpush2.msra.mxu0 0.0
  %415 = vmatprep.subr.mxu0 0.0
  %416 = vmatpush2.msra.mxu0 0.0
  %417 = vmatprep.subr.mxu0 0.0
  %418 = vmatpush2.msra.mxu0 0.0
  %419 = vmatprep.subr.mxu0 0.0
  %420 = vmatpush2.msra.mxu0 0.0
  %421 = vmatprep.subr.mxu0 0.0
  %422 = vmatpush2.msra.mxu0 0.0
  %423 = vmatprep.subr.mxu0 0.0
  %424 = vmatpush2.msra.mxu0 0.0
  %425 = vmatprep.subr.mxu0 0.0
  %426 = vmatpush2.msra.mxu0 0.0
  %427 = vmatprep.subr.mxu0 0.0
  %428 = vmatpush2.msra.mxu0 0.0
  %429 = vmatprep.subr.mxu0 0.0
  %430 = vmatpush2.msra.mxu0 0.0
  %431 = vmatprep.subr.mxu0 0.0
  %432 = vmatpush2.msra.mxu0 0.0
  %433 = vmatprep.subr.mxu0 0.0
  %434 = vmatpush2.msra.mxu0 0.0
  %435 = vmatprep.subr.mxu0 0.0
  %436 = vmatpush2.msra.mxu0 0.0
  %437 = vmatprep.subr.mxu0 0.0
  %438 = vmatpush2.msra.mxu0 0.0
  %439 = vmatprep.subr.mxu0 0.0
  %440 = vmatpush2.msra.mxu0 0.0
  %441 = vmatprep.mubr.f32.mxu0 0.0
  %442 = vmatmul.mubr.f32.gmra.mxu0 %v364
  %v443 = vpop.f32.mrf.mxu0
  %v444 = vadd.f32 %v48, %v443
  %v445 = vpop.f32.mrf.mxu0
  %446 = vmatprep.mubr.f32.mxu0 0.0
  %447 = vmatmul.mubr.f32.gmra.mxu0 %v365
  %v448 = vpop.f32.mrf.mxu0
  %v449 = vadd.f32 %v48, %v448
  %v450 = vpop.f32.mrf.mxu0
  %451 = vmatprep.mubr.f32.mxu0 0.0
  %452 = vmatmul.mubr.f32.gmra.mxu0 %v366
  %v453 = vpop.f32.mrf.mxu0
  %v454 = vadd.f32 %v48, %v453
  %v455 = vpop.f32.mrf.mxu0
  %456 = vmatprep.mubr.f32.mxu0 0.0
  %457 = vmatmul.mubr.f32.gmra.mxu0 %v367
  %v458 = vpop.f32.mrf.mxu0
  %v459 = vadd.f32 %v48, %v458
  %v460 = vpop.f32.mrf.mxu0
  %461 = vmatprep.mubr.f32.mxu0 0.0
  %462 = vmatmul.mubr.f32.gmra.mxu0 %v368
  %v463 = vpop.f32.mrf.mxu0
  %v464 = vadd.f32 %v48, %v463
  %v465 = vpop.f32.mrf.mxu0
  %466 = vmatprep.mubr.f32.mxu0 0.0
  %467 = vmatmul.mubr.f32.gmra.mxu0 %v369
  %v468 = vpop.f32.mrf.mxu0
  %v469 = vadd.f32 %v48, %v468
  %v470 = vpop.f32.mrf.mxu0
  %471 = vmatprep.mubr.f32.mxu0 0.0
  %472 = vmatmul.mubr.f32.gmra.mxu0 %v370
  %v473 = vpop.f32.mrf.mxu0
  %v474 = vadd.f32 %v48, %v473
  %v475 = vpop.f32.mrf.mxu0
  %476 = vmatprep.mubr.f32.mxu0 0.0
  %477 = vmatmul.mubr.f32.gmra.mxu0 %v371
  %v478 = vpop.f32.mrf.mxu0
  %v479 = vadd.f32 %v48, %v478
  %v480 = vpop.f32.mrf.mxu0
  %481 = vmatprep.mubr.f32.mxu0 0.0
  %482 = vmatmul.mubr.f32.gmra.mxu0 %v372
  %v483 = vpop.f32.mrf.mxu0
  %v484 = vadd.f32 %v48, %v483
  %v485 = vpop.f32.mrf.mxu0
  %486 = vmatprep.mubr.f32.mxu0 0.0
  %487 = vmatmul.mubr.f32.gmra.mxu0 %v373
  %v488 = vpop.f32.mrf.mxu0
  %v489 = vadd.f32 %v48, %v488
  %v490 = vpop.f32.mrf.mxu0
  %491 = vmatprep.mubr.f32.mxu0 0.0
  %492 = vmatmul.mubr.f32.gmra.mxu0 %v374
  %v493 = vpop.f32.mrf.mxu0
  %v494 = vadd.f32 %v48, %v493
  %v495 = vpop.f32.mrf.mxu0
  %496 = vmatprep.mubr.f32.mxu0 0.0
  %497 = vmatmul.mubr.f32.gmra.mxu0 %v375
  %v498 = vpop.f32.mrf.mxu0
  %v499 = vadd.f32 %v48, %v498
  %v500 = vpop.f32.mrf.mxu0
  %501 = vmatprep.mubr.f32.mxu0 0.0
  %502 = vmatmul.mubr.f32.gmra.mxu0 %v376
  %v503 = vpop.f32.mrf.mxu0
  %v504 = vadd.f32 %v48, %v503
  %v505 = vpop.f32.mrf.mxu0
  %506 = vdwg.mxu0
  %v507 = vmax.f32 %v444, 0.0
  %v508 = vmax.f32 %v449, 0.0
  %v509 = vmax.f32 %v454, 0.0
  %v510 = vmax.f32 %v459, 0.0
  %v511 = vmax.f32 %v464, 0.0
  %v512 = vmax.f32 %v469, 0.0
  %v513 = vmax.f32 %v474, 0.0
  %v514 = vmax.f32 %v479, 0.0
  %v515 = vmax.f32 %v484, 0.0
  %v516 = vmax.f32 %v489, 0.0
  %v517 = vmax.f32 %v494, 0.0
  %v518 = vmax.f32 %v499, 0.0
  %v519 = vmax.f32 %v504, 0.0
  %v520 = vmax.f32 %v350, %v507
  %v521 = vmax.f32 %v351, %v508
  %v522 = vmax.f32 %v352, %v509
  %v523 = vmax.f32 %v353, %v510
  %v524 = vmax.f32 %v354, %v511
  %v525 = vmax.f32 %v355, %v512
  %v526 = vmax.f32 %v356, %v513
  %v527 = vmax.f32 %v357, %v514
  %v528 = vmax.f32 %v358, %v515
  %v529 = vmax.f32 %v359, %v516
  %v530 = vmax.f32 %v360, %v517
  %v531 = vmax.f32 %v361, %v518
  %v532 = vmax.f32 %v362, %v519
  %s533 = scalar_lea.vmem %s0, 312
  %v534 = vld [vmem:[%s533] sm:$0xff]
  %v535 = vld [vmem:[%s533 + $0x8] sm:$0xff]
  %v536 = vld [vmem:[%s533 + $0x10] sm:$0xff]
  %v537 = vld [vmem:[%s533 + $0x18] sm:$0xff]
  %v538 = vld [vmem:[%s533 + $0x20] sm:$0xff]
  %v539 = vld [vmem:[%s533 + $0x28] sm:$0xff]
  %v540 = vld [vmem:[%s533 + $0x30] sm:$0xff]
  %v541 = vld [vmem:[%s533 + $0x38] sm:$0xff]
  %v542 = vld [vmem:[%s533 + $0x40] sm:$0xff]
  %v543 = vld [vmem:[%s533 + $0x48] sm:$0xff]
  %v544 = vld [vmem:[%s533 + $0x50] sm:$0xff]
  %v545 = vld [vmem:[%s533 + $0x58] sm:$0xff]
  %v546 = vld [vmem:[%s533 + $0x60] sm:$0x3]
  %547 = vmatprep.subr.mxu0 0.0
  %548 = vmatpush1.msra.mxu0 %v29
  %549 = vmatprep.subr.mxu0 0.0
  %550 = vmatpush1.msra.mxu0 %v28
  %551 = vmatprep.subr.mxu0 0.0
  %552 = vmatpush1.msra.mxu0 %v27
  %553 = vmatprep.subr.mxu0 0.0
  %554 = vmatpush1.msra.mxu0 %v26
  %555 = vmatprep.subr.mxu0 0.0
  %556 = vmatpush1.msra.mxu0 %v25
  %557 = vmatprep.subr.mxu0 0.0
  %558 = vmatpush1.msra.mxu0 %v24
  %559 = vmatprep.subr.mxu0 0.0
  %560 = vmatpush1.msra.mxu0 %v23
  %561 = vmatprep.subr.mxu0 0.0
  %562 = vmatpush1.msra.mxu0 %v22
  %563 = vmatprep.subr.mxu0 0.0
  %564 = vmatpush1.msra.mxu0 %v21
  %565 = vmatprep.subr.mxu0 0.0
  %566 = vmatpush1.msra.mxu0 %v20
  %567 = vmatprep.subr.mxu0 0.0
  %568 = vmatpush1.msra.mxu0 %v19
  %569 = vmatprep.subr.mxu0 0.0
  %570 = vmatpush1.msra.mxu0 %v18
  %571 = vmatprep.subr.mxu0 0.0
  %572 = vmatpush1.msra.mxu0 %v17
  %573 = vmatprep.subr.mxu0 0.0
  %574 = vmatpush1.msra.mxu0 %v16
  %575 = vmatprep.subr.mxu0 0.0
  %576 = vmatpush1.msra.mxu0 %v15
  %577 = vmatprep.subr.mxu0 0.0
  %578 = vmatpush1.msra.mxu0 %v14
  %579 = vmatprep.subr.mxu0 0.0
  %580 = vmatpush2.msra.mxu0 0.0
  %581 = vmatprep.subr.mxu0 0.0
  %582 = vmatpush2.msra.mxu0 0.0
  %583 = vmatprep.subr.mxu0 0.0
  %584 = vmatpush2.msra.mxu0 0.0
  %585 = vmatprep.subr.mxu0 0.0
  %586 = vmatpush2.msra.mxu0 0.0
  %587 = vmatprep.subr.mxu0 0.0
  %588 = vmatpush2.msra.mxu0 0.0
  %589 = vmatprep.subr.mxu0 0.0
  %590 = vmatpush2.msra.mxu0 0.0
  %591 = vmatprep.subr.mxu0 0.0
  %592 = vmatpush2.msra.mxu0 0.0
  %593 = vmatprep.subr.mxu0 0.0
  %594 = vmatpush2.msra.mxu0 0.0
  %595 = vmatprep.subr.mxu0 0.0
  %596 = vmatpush2.msra.mxu0 0.0
  %597 = vmatprep.subr.mxu0 0.0
  %598 = vmatpush2.msra.mxu0 0.0
  %599 = vmatprep.subr.mxu0 0.0
  %600 = vmatpush2.msra.mxu0 0.0
  %601 = vmatprep.subr.mxu0 0.0
  %602 = vmatpush2.msra.mxu0 0.0
  %603 = vmatprep.subr.mxu0 0.0
  %604 = vmatpush2.msra.mxu0 0.0
  %605 = vmatprep.subr.mxu0 0.0
  %606 = vmatpush2.msra.mxu0 0.0
  %607 = vmatprep.subr.mxu0 0.0
  %608 = vmatpush2.msra.mxu0 0.0
  %609 = vmatprep.subr.mxu0 0.0
  %610 = vmatpush2.msra.mxu0 0.0
  %611 = vmatprep.mubr.f32.mxu0 0.0
  %612 = vmatmul.mubr.f32.gmra.mxu0 %v534
  %v613 = vpop.f32.mrf.mxu0
  %v614 = vadd.f32 %v48, %v613
  %v615 = vpop.f32.mrf.mxu0
  %616 = vmatprep.mubr.f32.mxu0 0.0
  %617 = vmatmul.mubr.f32.gmra.mxu0 %v535
  %v618 = vpop.f32.mrf.mxu0
  %v619 = vadd.f32 %v48, %v618
  %v620 = vpop.f32.mrf.mxu0
  %621 = vmatprep.mubr.f32.mxu0 0.0
  %622 = vmatmul.mubr.f32.gmra.mxu0 %v536
  %v623 = vpop.f32.mrf.mxu0
  %v624 = vadd.f32 %v48, %v623
  %v625 = vpop.f32.mrf.mxu0
  %626 = vmatprep.mubr.f32.mxu0 0.0
  %627 = vmatmul.mubr.f32.gmra.mxu0 %v537
  %v628 = vpop.f32.mrf.mxu0
  %v629 = vadd.f32 %v48, %v628
  %v630 = vpop.f32.mrf.mxu0
  %631 = vmatprep.mubr.f32.mxu0 0.0
  %632 = vmatmul.mubr.f32.gmra.mxu0 %v538
  %v633 = vpop.f32.mrf.mxu0
  %v634 = vadd.f32 %v48, %v633
  %v635 = vpop.f32.mrf.mxu0
  %636 = vmatprep.mubr.f32.mxu0 0.0
  %637 = vmatmul.mubr.f32.gmra.mxu0 %v539
  %v638 = vpop.f32.mrf.mxu0
  %v639 = vadd.f32 %v48, %v638
  %v640 = vpop.f32.mrf.mxu0
  %641 = vmatprep.mubr.f32.mxu0 0.0
  %642 = vmatmul.mubr.f32.gmra.mxu0 %v540
  %v643 = vpop.f32.mrf.mxu0
  %v644 = vadd.f32 %v48, %v643
  %v645 = vpop.f32.mrf.mxu0
  %646 = vmatprep.mubr.f32.mxu0 0.0
  %647 = vmatmul.mubr.f32.gmra.mxu0 %v541
  %v648 = vpop.f32.mrf.mxu0
  %v649 = vadd.f32 %v48, %v648
  %v650 = vpop.f32.mrf.mxu0
  %651 = vmatprep.mubr.f32.mxu0 0.0
  %652 = vmatmul.mubr.f32.gmra.mxu0 %v542
  %v653 = vpop.f32.mrf.mxu0
  %v654 = vadd.f32 %v48, %v653
  %v655 = vpop.f32.mrf.mxu0
  %656 = vmatprep.mubr.f32.mxu0 0.0
  %657 = vmatmul.mubr.f32.gmra.mxu0 %v543
  %v658 = vpop.f32.mrf.mxu0
  %v659 = vadd.f32 %v48, %v658
  %v660 = vpop.f32.mrf.mxu0
  %661 = vmatprep.mubr.f32.mxu0 0.0
  %662 = vmatmul.mubr.f32.gmra.mxu0 %v544
  %v663 = vpop.f32.mrf.mxu0
  %v664 = vadd.f32 %v48, %v663
  %v665 = vpop.f32.mrf.mxu0
  %666 = vmatprep.mubr.f32.mxu0 0.0
  %667 = vmatmul.mubr.f32.gmra.mxu0 %v545
  %v668 = vpop.f32.mrf.mxu0
  %v669 = vadd.f32 %v48, %v668
  %v670 = vpop.f32.mrf.mxu0
  %671 = vmatprep.mubr.f32.mxu0 0.0
  %672 = vmatmul.mubr.f32.gmra.mxu0 %v546
  %v673 = vpop.f32.mrf.mxu0
  %v674 = vadd.f32 %v48, %v673
  %v675 = vpop.f32.mrf.mxu0
  %676 = vdwg.mxu0
  %v677 = vmax.f32 %v614, 0.0
  %v678 = vmax.f32 %v619, 0.0
  %v679 = vmax.f32 %v624, 0.0
  %v680 = vmax.f32 %v629, 0.0
  %v681 = vmax.f32 %v634, 0.0
  %v682 = vmax.f32 %v639, 0.0
  %v683 = vmax.f32 %v644, 0.0
  %v684 = vmax.f32 %v649, 0.0
  %v685 = vmax.f32 %v654, 0.0
  %v686 = vmax.f32 %v659, 0.0
  %v687 = vmax.f32 %v664, 0.0
  %v688 = vmax.f32 %v669, 0.0
  %v689 = vmax.f32 %v674, 0.0
  %v690 = vmax.f32 %v520, %v677
  %v691 = vmax.f32 %v521, %v678
  %v692 = vmax.f32 %v522, %v679
  %v693 = vmax.f32 %v523, %v680
  %v694 = vmax.f32 %v524, %v681
  %v695 = vmax.f32 %v525, %v682
  %v696 = vmax.f32 %v526, %v683
  %v697 = vmax.f32 %v527, %v684
  %v698 = vmax.f32 %v528, %v685
  %v699 = vmax.f32 %v529, %v686
  %v700 = vmax.f32 %v530, %v687
  %v701 = vmax.f32 %v531, %v688
  %v702 = vmax.f32 %v532, %v689
  %703 = vst [vmem:[%s3] sm:$0xff] %v690
  %704 = vst [vmem:[%s3 + $0x8] sm:$0xff] %v691
  %705 = vst [vmem:[%s3 + $0x10] sm:$0xff] %v692
  %706 = vst [vmem:[%s3 + $0x18] sm:$0xff] %v693
  %707 = vst [vmem:[%s3 + $0x20] sm:$0xff] %v694
  %708 = vst [vmem:[%s3 + $0x28] sm:$0xff] %v695
  %709 = vst [vmem:[%s3 + $0x30] sm:$0xff] %v696
  %710 = vst [vmem:[%s3 + $0x38] sm:$0xff] %v697
  %711 = vst [vmem:[%s3 + $0x40] sm:$0xff] %v698
  %712 = vst [vmem:[%s3 + $0x48] sm:$0xff] %v699
  %713 = vst [vmem:[%s3 + $0x50] sm:$0xff] %v700
  %714 = vst [vmem:[%s3 + $0x58] sm:$0xff] %v701
  %715 = vst [vmem:[%s3 + $0x60] sm:$0x3] %v702
  // Predicated region
  $region14: #{lenet_forward.3} parent=0 // pred_check
    _
  $region15: #{lenet_forward.3} parent=0 // pred_check_branch
    %717 = sbr.rel (0) target = $region17
  $region16: #{lenet_forward.3} parent=0 // pred_region
    _
  $region17: #{lenet_forward.3} parent=0 // pred_fallthru
    _
  // Predicated region
  $region18: #{lenet_forward.3} parent=0 // pred_check
    _
  $region19: #{lenet_forward.3} parent=0 // pred_check_branch
    %719 = sbr.rel (0) target = $region21
  $region20: #{lenet_forward.3} parent=0 // pred_region
    _
  $region21: #{lenet_forward.3} parent=0 // pred_fallthru
    _

// kernel: lenet_forward.5
$region0: #{lenet_forward.5}
  #allocation0 [shape = 'u32[]', space=smem, size = 0x4, offset = 0x4, fixed_abs, tag = 'smem constant byte address 0x4 - core index']
  #allocation1 [shape = 'u32[144,128]{1,0:T(1,128)}', space=vmem, size = 0x12000, scoped, tag = 'internal scratch']
  %s0 = inlined_call_operand.vmem [shape: f32[2,512], index: 0, kind: input, shape index: {}]
  %s1 = inlined_call_operand.vmem [shape: f32[512,128], index: 1, kind: input, shape index: {}]
  %s2 = inlined_call_operand.vmem [shape: f32[1,128], index: 2, kind: input, shape index: {}]
  %s3 = inlined_call_operand.vmem [shape: f32[128,128], index: 3, kind: input, shape index: {}]
  %s4 = inlined_call_operand.vmem [shape: f32[1,128], index: 4, kind: input, shape index: {}]
  %s5 = inlined_call_operand.vmem [shape: f32[128,128], index: 5, kind: input, shape index: {}]
  %s6 = inlined_call_operand.vmem [shape: f32[1,128], index: 6, kind: input, shape index: {}]
  %s7 = inlined_call_operand.hbm [shape: f32[2,128], index: 7, kind: output, shape index: {}]
  %s8 = sld [smem:[#allocation0]]
  $region38: #{lenet_forward.5} parent=0
    _
  %s10 = ssub.s32 1, %s8
  %s11 = scalar_select 0, %s10, %s8
  $region1: #{lenet_forward.5} parent=0
    #allocation2 [shape = 'u8[1024]{0}', space=vmem, size = 0x400, scoped, tag = 'output window, operand 0, single buffered']
    #allocation3 [shape = 's32[1]{0}', space=sflag, size = 0x4, scoped, tag = 'scoped memory for lenet_forward.5']
    %12 = vsyncpa [#allocation3], 0
    // Predicated region
    $region2: #{lenet_forward.5} parent=1 // pred_check
      _
    $region3: #{lenet_forward.5} parent=1 // pred_check_branch
      %14 = sbr.rel (0) target = $region5
    $region4: #{lenet_forward.5} parent=1 // pred_region
      _
    $region5: #{lenet_forward.5} parent=1 // pred_fallthru
      _
    // Predicated region
    $region6: #{lenet_forward.5} parent=1 // pred_check
      _
    $region7: #{lenet_forward.5} parent=1 // pred_check_branch
      %16 = sbr.rel (0) target = $region9
    $region8: #{lenet_forward.5} parent=1 // pred_region
      _
    $region9: #{lenet_forward.5} parent=1 // pred_fallthru
      _
    // Predicated region
    $region10: #{lenet_forward.5} parent=1 // pred_check
      _
    $region11: #{lenet_forward.5} parent=1 // pred_check_branch
      %18 = sbr.rel (0) target = $region13
    $region12: #{lenet_forward.5} parent=1 // pred_region
      _
    $region13: #{lenet_forward.5} parent=1 // pred_fallthru
      _
    // Predicated region
    $region14: #{lenet_forward.5} parent=1 // pred_check
      _
    $region15: #{lenet_forward.5} parent=1 // pred_check_branch
      %20 = sbr.rel (0) target = $region17
    $region16: #{lenet_forward.5} parent=1 // pred_region
      _
    $region17: #{lenet_forward.5} parent=1 // pred_fallthru
      _
    // Predicated region
    $region18: #{lenet_forward.5} parent=1 // pred_check
      _
    $region19: #{lenet_forward.5} parent=1 // pred_check_branch
      %22 = sbr.rel (0) target = $region21
    $region20: #{lenet_forward.5} parent=1 // pred_region
      _
    $region21: #{lenet_forward.5} parent=1 // pred_fallthru
      _
    // Predicated region
    $region22: #{lenet_forward.5} parent=1 // pred_check
      _
    $region23: #{lenet_forward.5} parent=1 // pred_check_branch
      %24 = sbr.rel (0) target = $region25
    $region24: #{lenet_forward.5} parent=1 // pred_region
      _
    $region25: #{lenet_forward.5} parent=1 // pred_fallthru
      _
    // Predicated region
    $region26: #{lenet_forward.5} parent=1 // pred_check
      _
    $region27: #{lenet_forward.5} parent=1 // pred_check_branch
      %26 = sbr.rel (0) target = $region29
    $region28: #{lenet_forward.5} parent=1 // pred_region
      _
    $region29: #{lenet_forward.5} parent=1 // pred_fallthru
      _
    %v27 = vld [vmem:[%s0] sm:$0xff]
    %v28 = vld [vmem:[%s1] sm:$0xff]
    %v29 = vld [vmem:[%s1 + $0x8] sm:$0xff]
    %v30 = vld [vmem:[%s1 + $0x10] sm:$0xff]
    %v31 = vld [vmem:[%s1 + $0x18] sm:$0xff]
    %v32 = vld [vmem:[%s1 + $0x20] sm:$0xff]
    %v33 = vld [vmem:[%s1 + $0x28] sm:$0xff]
    %v34 = vld [vmem:[%s1 + $0x30] sm:$0xff]
    %v35 = vld [vmem:[%s1 + $0x38] sm:$0xff]
    %v36 = vld [vmem:[%s1 + $0x40] sm:$0xff]
    %v37 = vld [vmem:[%s1 + $0x48] sm:$0xff]
    %v38 = vld [vmem:[%s1 + $0x50] sm:$0xff]
    %v39 = vld [vmem:[%s1 + $0x58] sm:$0xff]
    %v40 = vld [vmem:[%s1 + $0x60] sm:$0xff]
    %v41 = vld [vmem:[%s1 + $0x68] sm:$0xff]
    %v42 = vld [vmem:[%s1 + $0x70] sm:$0xff]
    %v43 = vld [vmem:[%s1 + $0x78] sm:$0xff]
    %v44 = vld [vmem:[%s1 + $0x80] sm:$0xff]
    %v45 = vld [vmem:[%s1 + $0x88] sm:$0xff]
    %v46 = vld [vmem:[%s1 + $0x90] sm:$0xff]
    %v47 = vld [vmem:[%s1 + $0x98] sm:$0xff]
    %v48 = vld [vmem:[%s1 + $0xa0] sm:$0xff]
    %v49 = vld [vmem:[%s1 + $0xa8] sm:$0xff]
    %v50 = vld [vmem:[%s1 + $0xb0] sm:$0xff]
    %v51 = vld [vmem:[%s1 + $0xb8] sm:$0xff]
    %v52 = vld [vmem:[%s1 + $0xc0] sm:$0xff]
    %v53 = vld [vmem:[%s1 + $0xc8] sm:$0xff]
    %v54 = vld [vmem:[%s1 + $0xd0] sm:$0xff]
    %v55 = vld [vmem:[%s1 + $0xd8] sm:$0xff]
    %v56 = vld [vmem:[%s1 + $0xe0] sm:$0xff]
    %v57 = vld [vmem:[%s1 + $0xe8] sm:$0xff]
    %v58 = vld [vmem:[%s1 + $0xf0] sm:$0xff]
    %v59 = vld [vmem:[%s1 + $0xf8] sm:$0xff]
    %v60 = vld [vmem:[%s1 + $0x100] sm:$0xff]
    %v61 = vld [vmem:[%s1 + $0x108] sm:$0xff]
    %v62 = vld [vmem:[%s1 + $0x110] sm:$0xff]
    %v63 = vld [vmem:[%s1 + $0x118] sm:$0xff]
    %v64 = vld [vmem:[%s1 + $0x120] sm:$0xff]
    %v65 = vld [vmem:[%s1 + $0x128] sm:$0xff]
    %v66 = vld [vmem:[%s1 + $0x130] sm:$0xff]
    %v67 = vld [vmem:[%s1 + $0x138] sm:$0xff]
    %v68 = vld [vmem:[%s1 + $0x140] sm:$0xff]
    %v69 = vld [vmem:[%s1 + $0x148] sm:$0xff]
    %v70 = vld [vmem:[%s1 + $0x150] sm:$0xff]
    %v71 = vld [vmem:[%s1 + $0x158] sm:$0xff]
    %v72 = vld [vmem:[%s1 + $0x160] sm:$0xff]
    %v73 = vld [vmem:[%s1 + $0x168] sm:$0xff]
    %v74 = vld [vmem:[%s1 + $0x170] sm:$0xff]
    %v75 = vld [vmem:[%s1 + $0x178] sm:$0xff]
    %v76 = vld [vmem:[%s1 + $0x180] sm:$0xff]
    %v77 = vld [vmem:[%s1 + $0x188] sm:$0xff]
    %v78 = vld [vmem:[%s1 + $0x190] sm:$0xff]
    %v79 = vld [vmem:[%s1 + $0x198] sm:$0xff]
    %v80 = vld [vmem:[%s1 + $0x1a0] sm:$0xff]
    %v81 = vld [vmem:[%s1 + $0x1a8] sm:$0xff]
    %v82 = vld [vmem:[%s1 + $0x1b0] sm:$0xff]
    %v83 = vld [vmem:[%s1 + $0x1b8] sm:$0xff]
    %v84 = vld [vmem:[%s1 + $0x1c0] sm:$0xff]
    %v85 = vld [vmem:[%s1 + $0x1c8] sm:$0xff]
    %v86 = vld [vmem:[%s1 + $0x1d0] sm:$0xff]
    %v87 = vld [vmem:[%s1 + $0x1d8] sm:$0xff]
    %v88 = vld [vmem:[%s1 + $0x1e0] sm:$0xff]
    %v89 = vld [vmem:[%s1 + $0x1e8] sm:$0xff]
    %v90 = vld [vmem:[%s1 + $0x1f0] sm:$0xff]
    %v91 = vld [vmem:[%s1 + $0x1f8] sm:$0xff]
    %v92 = vld [vmem:[%s2] sm:$0x1]
    %v94 = vlaneseq
    %v95 = vshrl.u32 %v94, 7
    %v96 = vsub.s32 0, %v95
    %v97 = vrot.slane %v92, %v96
    %v100 = vcombine.high %v27, %v27
    %v102 = vunpack.c.l.s4 1983009808
    %v103 = vunpack.c.0.s8 %v102
    %v104 = vlaneseq
    %v105 = vshrl.u32 %v104, 7
    %v106 = vsub.s32 %v103, %v105
    %v107 = vrot.slane %v27, %v106
    %v109 = vunpack.c.l.s4 1983009808
    %v110 = vunpack.c.0.s8 %v109
    %v111 = vlaneseq
    %v112 = vshrl.u32 %v111, 7
    %v113 = vsub.s32 %v110, %v112
    %v114 = vrot.slane %v100, %v113
    %v115 = vcombine.high %v107, %v107
    %v116 = vcombine.high %v114, %v114
    %121 = vmatprep.subr.mxu0 0.0
    %122 = vmatpush1.msra.mxu0 %v43
    %123 = vmatprep.subr.mxu0 0.0
    %124 = vmatpush1.msra.mxu0 %v42
    %125 = vmatprep.subr.mxu0 0.0
    %126 = vmatpush1.msra.mxu0 %v41
    %127 = vmatprep.subr.mxu0 0.0
    %128 = vmatpush1.msra.mxu0 %v40
    %129 = vmatprep.subr.mxu0 0.0
    %130 = vmatpush1.msra.mxu0 %v39
    %131 = vmatprep.subr.mxu0 0.0
    %132 = vmatpush1.msra.mxu0 %v38
    %133 = vmatprep.subr.mxu0 0.0
    %134 = vmatpush1.msra.mxu0 %v37
    %135 = vmatprep.subr.mxu0 0.0
    %136 = vmatpush1.msra.mxu0 %v36
    %137 = vmatprep.subr.mxu0 0.0
    %138 = vmatpush1.msra.mxu0 %v35
    %139 = vmatprep.subr.mxu0 0.0
    %140 = vmatpush1.msra.mxu0 %v34
    %141 = vmatprep.subr.mxu0 0.0
    %142 = vmatpush1.msra.mxu0 %v33
    %143 = vmatprep.subr.mxu0 0.0
    %144 = vmatpush1.msra.mxu0 %v32
    %145 = vmatprep.subr.mxu0 0.0
    %146 = vmatpush1.msra.mxu0 %v31
    %147 = vmatprep.subr.mxu0 0.0
    %148 = vmatpush1.msra.mxu0 %v30
    %149 = vmatprep.subr.mxu0 0.0
    %150 = vmatpush1.msra.mxu0 %v29
    %151 = vmatprep.subr.mxu0 0.0
    %152 = vmatpush1.msra.mxu0 %v28
    %153 = vmatprep.subr.mxu0 0.0
    %154 = vmatpush2.msra.mxu0 %v59
    %155 = vmatprep.subr.mxu0 0.0
    %156 = vmatpush2.msra.mxu0 %v58
    %157 = vmatprep.subr.mxu0 0.0
    %158 = vmatpush2.msra.mxu0 %v57
    %159 = vmatprep.subr.mxu0 0.0
    %160 = vmatpush2.msra.mxu0 %v56
    %161 = vmatprep.subr.mxu0 0.0
    %162 = vmatpush2.msra.mxu0 %v55
    %163 = vmatprep.subr.mxu0 0.0
    %164 = vmatpush2.msra.mxu0 %v54
    %165 = vmatprep.subr.mxu0 0.0
    %166 = vmatpush2.msra.mxu0 %v53
    %167 = vmatprep.subr.mxu0 0.0
    %168 = vmatpush2.msra.mxu0 %v52
    %169 = vmatprep.subr.mxu0 0.0
    %170 = vmatpush2.msra.mxu0 %v51
    %171 = vmatprep.subr.mxu0 0.0
    %172 = vmatpush2.msra.mxu0 %v50
    %173 = vmatprep.subr.mxu0 0.0
    %174 = vmatpush2.msra.mxu0 %v49
    %175 = vmatprep.subr.mxu0 0.0
    %176 = vmatpush2.msra.mxu0 %v48
    %177 = vmatprep.subr.mxu0 0.0
    %178 = vmatpush2.msra.mxu0 %v47
    %179 = vmatprep.subr.mxu0 0.0
    %180 = vmatpush2.msra.mxu0 %v46
    %181 = vmatprep.subr.mxu0 0.0
    %182 = vmatpush2.msra.mxu0 %v45
    %183 = vmatprep.subr.mxu0 0.0
    %184 = vmatpush2.msra.mxu0 %v44
    %185 = vmatprep.mubr.f32.mxu0 %v115
    %186 = vmatmul.mubr.f32.gmra.mxu0 %v107
    %v187 = vpop.f32.mrf.mxu0
    %v188 = vadd.f32 %v97, %v187
    %v189 = vpop.f32.mrf.mxu0
    %190 = vdwg.mxu0
    %191 = vmatprep.subr.mxu0 0.0
    %192 = vmatpush1.msra.mxu0 %v75
    %193 = vmatprep.subr.mxu0 0.0
    %194 = vmatpush1.msra.mxu0 %v74
    %195 = vmatprep.subr.mxu0 0.0
    %196 = vmatpush1.msra.mxu0 %v73
    %197 = vmatprep.subr.mxu0 0.0
    %198 = vmatpush1.msra.mxu0 %v72
    %199 = vmatprep.subr.mxu0 0.0
    %200 = vmatpush1.msra.mxu0 %v71
    %201 = vmatprep.subr.mxu0 0.0
    %202 = vmatpush1.msra.mxu0 %v70
    %203 = vmatprep.subr.mxu0 0.0
    %204 = vmatpush1.msra.mxu0 %v69
    %205 = vmatprep.subr.mxu0 0.0
    %206 = vmatpush1.msra.mxu0 %v68
    %207 = vmatprep.subr.mxu0 0.0
    %208 = vmatpush1.msra.mxu0 %v67
    %209 = vmatprep.subr.mxu0 0.0
    %210 = vmatpush1.msra.mxu0 %v66
    %211 = vmatprep.subr.mxu0 0.0
    %212 = vmatpush1.msra.mxu0 %v65
    %213 = vmatprep.subr.mxu0 0.0
    %214 = vmatpush1.msra.mxu0 %v64
    %215 = vmatprep.subr.mxu0 0.0
    %216 = vmatpush1.msra.mxu0 %v63
    %217 = vmatprep.subr.mxu0 0.0
    %218 = vmatpush1.msra.mxu0 %v62
    %219 = vmatprep.subr.mxu0 0.0
    %220 = vmatpush1.msra.mxu0 %v61
    %221 = vmatprep.subr.mxu0 0.0
    %222 = vmatpush1.msra.mxu0 %v60
    %223 = vmatprep.subr.mxu0 0.0
    %224 = vmatpush2.msra.mxu0 %v91
    %225 = vmatprep.subr.mxu0 0.0
    %226 = vmatpush2.msra.mxu0 %v90
    %227 = vmatprep.subr.mxu0 0.0
    %228 = vmatpush2.msra.mxu0 %v89
    %229 = vmatprep.subr.mxu0 0.0
    %230 = vmatpush2.msra.mxu0 %v88
    %231 = vmatprep.subr.mxu0 0.0
    %232 = vmatpush2.msra.mxu0 %v87
    %233 = vmatprep.subr.mxu0 0.0
    %234 = vmatpush2.msra.mxu0 %v86
    %235 = vmatprep.subr.mxu0 0.0
    %236 = vmatpush2.msra.mxu0 %v85
    %237 = vmatprep.subr.mxu0 0.0
    %238 = vmatpush2.msra.mxu0 %v84
    %239 = vmatprep.subr.mxu0 0.0
    %240 = vmatpush2.msra.mxu0 %v83
    %241 = vmatprep.subr.mxu0 0.0
    %242 = vmatpush2.msra.mxu0 %v82
    %243 = vmatprep.subr.mxu0 0.0
    %244 = vmatpush2.msra.mxu0 %v81
    %245 = vmatprep.subr.mxu0 0.0
    %246 = vmatpush2.msra.mxu0 %v80
    %247 = vmatprep.subr.mxu0 0.0
    %248 = vmatpush2.msra.mxu0 %v79
    %249 = vmatprep.subr.mxu0 0.0
    %250 = vmatpush2.msra.mxu0 %v78
    %251 = vmatprep.subr.mxu0 0.0
    %252 = vmatpush2.msra.mxu0 %v77
    %253 = vmatprep.subr.mxu0 0.0
    %254 = vmatpush2.msra.mxu0 %v76
    %255 = vmatprep.mubr.f32.mxu0 %v116
    %256 = vmatmul.mubr.f32.gmra.mxu0 %v114
    %v257 = vpop.f32.mrf.mxu0
    %v258 = vadd.f32 %v188, %v257
    %v259 = vpop.f32.mrf.mxu0
    %260 = vdwg.mxu0
    %v261 = vmax.f32 %v258, 0.0
    %v262 = vld [vmem:[%s3] sm:$0xff]
    %v263 = vld [vmem:[%s3 + $0x8] sm:$0xff]
    %v264 = vld [vmem:[%s3 + $0x10] sm:$0xff]
    %v265 = vld [vmem:[%s3 + $0x18] sm:$0xff]
    %v266 = vld [vmem:[%s3 + $0x20] sm:$0xff]
    %v267 = vld [vmem:[%s3 + $0x28] sm:$0xff]
    %v268 = vld [vmem:[%s3 + $0x30] sm:$0xff]
    %v269 = vld [vmem:[%s3 + $0x38] sm:$0xff]
    %v270 = vld [vmem:[%s3 + $0x40] sm:$0xff]
    %v271 = vld [vmem:[%s3 + $0x48] sm:$0xff]
    %v272 = vld [vmem:[%s3 + $0x50] sm:$0xff]
    %v273 = vld [vmem:[%s3 + $0x58] sm:$0xff]
    %v274 = vld [vmem:[%s3 + $0x60] sm:$0xff]
    %v275 = vld [vmem:[%s3 + $0x68] sm:$0xff]
    %v276 = vld [vmem:[%s3 + $0x70] sm:$0xff]
    %v277 = vld [vmem:[%s3 + $0x78] sm:$0xff]
    %v278 = vld [vmem:[%s4] sm:$0x1]
    %v280 = vlaneseq
    %v281 = vshrl.u32 %v280, 7
    %v282 = vsub.s32 0, %v281
    %v283 = vrot.slane %v278, %v282
    %285 = vmatprep.subr.mxu0 0.0
    %286 = vmatpush1.msra.mxu0 %v277
    %287 = vmatprep.subr.mxu0 0.0
    %288 = vmatpush1.msra.mxu0 %v276
    %289 = vmatprep.subr.mxu0 0.0
    %290 = vmatpush1.msra.mxu0 %v275
    %291 = vmatprep.subr.mxu0 0.0
    %292 = vmatpush1.msra.mxu0 %v274
    %293 = vmatprep.subr.mxu0 0.0
    %294 = vmatpush1.msra.mxu0 %v273
    %295 = vmatprep.subr.mxu0 0.0
    %296 = vmatpush1.msra.mxu0 %v272
    %297 = vmatprep.subr.mxu0 0.0
    %298 = vmatpush1.msra.mxu0 %v271
    %299 = vmatprep.subr.mxu0 0.0
    %300 = vmatpush1.msra.mxu0 %v270
    %301 = vmatprep.subr.mxu0 0.0
    %302 = vmatpush1.msra.mxu0 %v269
    %303 = vmatprep.subr.mxu0 0.0
    %304 = vmatpush1.msra.mxu0 %v268
    %305 = vmatprep.subr.mxu0 0.0
    %306 = vmatpush1.msra.mxu0 %v267
    %307 = vmatprep.subr.mxu0 0.0
    %308 = vmatpush1.msra.mxu0 %v266
    %309 = vmatprep.subr.mxu0 0.0
    %310 = vmatpush1.msra.mxu0 %v265
    %311 = vmatprep.subr.mxu0 0.0
    %312 = vmatpush1.msra.mxu0 %v264
    %313 = vmatprep.subr.mxu0 0.0
    %314 = vmatpush1.msra.mxu0 %v263
    %315 = vmatprep.subr.mxu0 0.0
    %316 = vmatpush1.msra.mxu0 %v262
    %317 = vmatprep.subr.mxu0 0.0
    %318 = vmatpush2.msra.mxu0 0.0
    %319 = vmatprep.subr.mxu0 0.0
    %320 = vmatpush2.msra.mxu0 0.0
    %321 = vmatprep.subr.mxu0 0.0
    %322 = vmatpush2.msra.mxu0 0.0
    %323 = vmatprep.subr.mxu0 0.0
    %324 = vmatpush2.msra.mxu0 0.0
    %325 = vmatprep.subr.mxu0 0.0
    %326 = vmatpush2.msra.mxu0 0.0
    %327 = vmatprep.subr.mxu0 0.0
    %328 = vmatpush2.msra.mxu0 0.0
    %329 = vmatprep.subr.mxu0 0.0
    %330 = vmatpush2.msra.mxu0 0.0
    %331 = vmatprep.subr.mxu0 0.0
    %332 = vmatpush2.msra.mxu0 0.0
    %333 = vmatprep.subr.mxu0 0.0
    %334 = vmatpush2.msra.mxu0 0.0
    %335 = vmatprep.subr.mxu0 0.0
    %336 = vmatpush2.msra.mxu0 0.0
    %337 = vmatprep.subr.mxu0 0.0
    %338 = vmatpush2.msra.mxu0 0.0
    %339 = vmatprep.subr.mxu0 0.0
    %340 = vmatpush2.msra.mxu0 0.0
    %341 = vmatprep.subr.mxu0 0.0
    %342 = vmatpush2.msra.mxu0 0.0
    %343 = vmatprep.subr.mxu0 0.0
    %344 = vmatpush2.msra.mxu0 0.0
    %345 = vmatprep.subr.mxu0 0.0
    %346 = vmatpush2.msra.mxu0 0.0
    %347 = vmatprep.subr.mxu0 0.0
    %348 = vmatpush2.msra.mxu0 0.0
    %349 = vmatprep.mubr.f32.mxu0 0.0
    %350 = vmatmul.mubr.f32.gmra.mxu0 %v261
    %v351 = vpop.f32.mrf.mxu0
    %v352 = vadd.f32 %v283, %v351
    %v353 = vpop.f32.mrf.mxu0
    %354 = vdwg.mxu0
    %v355 = vmax.f32 %v352, 0.0
    %v356 = vld [vmem:[%s5] sm:$0xff]
    %v357 = vld [vmem:[%s5 + $0x8] sm:$0xff]
    %v358 = vld [vmem:[%s5 + $0x10] sm:$0xff]
    %v359 = vld [vmem:[%s5 + $0x18] sm:$0xff]
    %v360 = vld [vmem:[%s5 + $0x20] sm:$0xff]
    %v361 = vld [vmem:[%s5 + $0x28] sm:$0xff]
    %v362 = vld [vmem:[%s5 + $0x30] sm:$0xff]
    %v363 = vld [vmem:[%s5 + $0x38] sm:$0xff]
    %v364 = vld [vmem:[%s5 + $0x40] sm:$0xff]
    %v365 = vld [vmem:[%s5 + $0x48] sm:$0xff]
    %v366 = vld [vmem:[%s5 + $0x50] sm:$0xff]
    %v367 = vld [vmem:[%s5 + $0x58] sm:$0xff]
    %v368 = vld [vmem:[%s5 + $0x60] sm:$0xff]
    %v369 = vld [vmem:[%s5 + $0x68] sm:$0xff]
    %v370 = vld [vmem:[%s5 + $0x70] sm:$0xff]
    %v371 = vld [vmem:[%s5 + $0x78] sm:$0xff]
    %v372 = vld [vmem:[%s6] sm:$0x1]
    %v374 = vlaneseq
    %v375 = vshrl.u32 %v374, 7
    %v376 = vsub.s32 0, %v375
    %v377 = vrot.slane %v372, %v376
    %379 = vmatprep.subr.mxu0 0.0
    %380 = vmatpush1.msra.mxu0 %v371
    %381 = vmatprep.subr.mxu0 0.0
    %382 = vmatpush1.msra.mxu0 %v370
    %383 = vmatprep.subr.mxu0 0.0
    %384 = vmatpush1.msra.mxu0 %v369
    %385 = vmatprep.subr.mxu0 0.0
    %386 = vmatpush1.msra.mxu0 %v368
    %387 = vmatprep.subr.mxu0 0.0
    %388 = vmatpush1.msra.mxu0 %v367
    %389 = vmatprep.subr.mxu0 0.0
    %390 = vmatpush1.msra.mxu0 %v366
    %391 = vmatprep.subr.mxu0 0.0
    %392 = vmatpush1.msra.mxu0 %v365
    %393 = vmatprep.subr.mxu0 0.0
    %394 = vmatpush1.msra.mxu0 %v364
    %395 = vmatprep.subr.mxu0 0.0
    %396 = vmatpush1.msra.mxu0 %v363
    %397 = vmatprep.subr.mxu0 0.0
    %398 = vmatpush1.msra.mxu0 %v362
    %399 = vmatprep.subr.mxu0 0.0
    %400 = vmatpush1.msra.mxu0 %v361
    %401 = vmatprep.subr.mxu0 0.0
    %402 = vmatpush1.msra.mxu0 %v360
    %403 = vmatprep.subr.mxu0 0.0
    %404 = vmatpush1.msra.mxu0 %v359
    %405 = vmatprep.subr.mxu0 0.0
    %406 = vmatpush1.msra.mxu0 %v358
    %407 = vmatprep.subr.mxu0 0.0
    %408 = vmatpush1.msra.mxu0 %v357
    %409 = vmatprep.subr.mxu0 0.0
    %410 = vmatpush1.msra.mxu0 %v356
    %411 = vmatprep.subr.mxu0 0.0
    %412 = vmatpush2.msra.mxu0 0.0
    %413 = vmatprep.subr.mxu0 0.0
    %414 = vmatpush2.msra.mxu0 0.0
    %415 = vmatprep.subr.mxu0 0.0
    %416 = vmatpush2.msra.mxu0 0.0
    %417 = vmatprep.subr.mxu0 0.0
    %418 = vmatpush2.msra.mxu0 0.0
    %419 = vmatprep.subr.mxu0 0.0
    %420 = vmatpush2.msra.mxu0 0.0
    %421 = vmatprep.subr.mxu0 0.0
    %422 = vmatpush2.msra.mxu0 0.0
    %423 = vmatprep.subr.mxu0 0.0
    %424 = vmatpush2.msra.mxu0 0.0
    %425 = vmatprep.subr.mxu0 0.0
    %426 = vmatpush2.msra.mxu0 0.0
    %427 = vmatprep.subr.mxu0 0.0
    %428 = vmatpush2.msra.mxu0 0.0
    %429 = vmatprep.subr.mxu0 0.0
    %430 = vmatpush2.msra.mxu0 0.0
    %431 = vmatprep.subr.mxu0 0.0
    %432 = vmatpush2.msra.mxu0 0.0
    %433 = vmatprep.subr.mxu0 0.0
    %434 = vmatpush2.msra.mxu0 0.0
    %435 = vmatprep.subr.mxu0 0.0
    %436 = vmatpush2.msra.mxu0 0.0
    %437 = vmatprep.subr.mxu0 0.0
    %438 = vmatpush2.msra.mxu0 0.0
    %439 = vmatprep.subr.mxu0 0.0
    %440 = vmatpush2.msra.mxu0 0.0
    %441 = vmatprep.subr.mxu0 0.0
    %442 = vmatpush2.msra.mxu0 0.0
    %443 = vmatprep.mubr.f32.mxu0 0.0
    %444 = vmatmul.mubr.f32.gmra.mxu0 %v355
    %v445 = vpop.f32.mrf.mxu0
    %v446 = vadd.f32 %v377, %v445
    %v447 = vpop.f32.mrf.mxu0
    %448 = vdwg.mxu0
    %449 = vst [vmem:[#allocation2] sm:$0x3] %v446
    // Predicated region
    $region30: #{lenet_forward.5} parent=1 // pred_check
      _
    $region31: #{lenet_forward.5} parent=1 // pred_check_branch
      %451 = sbr.rel (0) target = $region33
    $region32: #{lenet_forward.5} parent=1 // pred_region
      %s453 = ssub.s32 32, 32
      %454 = vsyncadd [#allocation3], %s453
      %s456 = sshll.u32 [#allocation2], 4
      %s457 = int_to_ptr.vmem [resolvable:$true] %s456
      %459 = dma.vmem_to_hbm [thread:$0]  %s457, 32, %s7, [#allocation3]
    $region33: #{lenet_forward.5} parent=1 // pred_fallthru
      _
    // Predicated region
    $region34: #{lenet_forward.5} parent=1 // pred_check
      _
    $region35: #{lenet_forward.5} parent=1 // pred_check_branch
      %461 = sbr.rel (0) target = $region37
    $region36: #{lenet_forward.5} parent=1 // pred_region
      %462 = dma.done [#allocation3], 32
    $region37: #{lenet_forward.5} parent=1 // pred_fallthru
      _
    %463 = vsyncpa [#allocation3], 1

// kernel: lenet_forward.4
$region0: #{lenet_forward.4}
  #allocation0 [shape = 'u32[]', space=smem, size = 0x4, offset = 0x4, fixed_abs, tag = 'smem constant byte address 0x4 - core index']
  #allocation1 [shape = 'u32[144,128]{1,0:T(1,128)}', space=vmem, size = 0x12000, scoped, tag = 'internal scratch']
  %s0 = inlined_call_operand.vmem [shape: f32[4,8,256], index: 0, kind: input, shape index: {}]
  %s1 = inlined_call_operand.vmem [shape: f32[256,128], index: 1, kind: input, shape index: {}]
  %s2 = inlined_call_operand.vmem [shape: f32[1,128], index: 2, kind: input, shape index: {}]
  %s3 = inlined_call_operand.vmem [shape: f32[8,128], index: 3, kind: output, shape index: {}]
  %s4 = sld [smem:[#allocation0]]
  $region22: #{lenet_forward.4} parent=0
    _
  %s6 = ssub.s32 1, %s4
  %s7 = scalar_select 0, %s6, %s4
  // Predicated region
  $region2: #{lenet_forward.4} parent=0 // pred_check
    _
  $region3: #{lenet_forward.4} parent=0 // pred_check_branch
    %9 = sbr.rel (0) target = $region5
  $region4: #{lenet_forward.4} parent=0 // pred_region
    _
  $region5: #{lenet_forward.4} parent=0 // pred_fallthru
    _
  // Predicated region
  $region6: #{lenet_forward.4} parent=0 // pred_check
    _
  $region7: #{lenet_forward.4} parent=0 // pred_check_branch
    %11 = sbr.rel (0) target = $region9
  $region8: #{lenet_forward.4} parent=0 // pred_region
    _
  $region9: #{lenet_forward.4} parent=0 // pred_fallthru
    _
  // Predicated region
  $region10: #{lenet_forward.4} parent=0 // pred_check
    _
  $region11: #{lenet_forward.4} parent=0 // pred_check_branch
    %13 = sbr.rel (0) target = $region13
  $region12: #{lenet_forward.4} parent=0 // pred_region
    _
  $region13: #{lenet_forward.4} parent=0 // pred_fallthru
    _
  %v14 = vld [vmem:[%s1] sm:$0xff]
  %v15 = vld [vmem:[%s1 + $0x8] sm:$0xff]
  %v16 = vld [vmem:[%s1 + $0x10] sm:$0xff]
  %v17 = vld [vmem:[%s1 + $0x18] sm:$0xff]
  %v18 = vld [vmem:[%s1 + $0x20] sm:$0xff]
  %v19 = vld [vmem:[%s1 + $0x28] sm:$0xff]
  %v20 = vld [vmem:[%s1 + $0x30] sm:$0xff]
  %v21 = vld [vmem:[%s1 + $0x38] sm:$0xff]
  %v22 = vld [vmem:[%s1 + $0x40] sm:$0xff]
  %v23 = vld [vmem:[%s1 + $0x48] sm:$0xff]
  %v24 = vld [vmem:[%s1 + $0x50] sm:$0xff]
  %v25 = vld [vmem:[%s1 + $0x58] sm:$0xff]
  %v26 = vld [vmem:[%s1 + $0x60] sm:$0xff]
  %v27 = vld [vmem:[%s1 + $0x68] sm:$0xff]
  %v28 = vld [vmem:[%s1 + $0x70] sm:$0xff]
  %v29 = vld [vmem:[%s1 + $0x78] sm:$0xff]
  %v30 = vld [vmem:[%s1 + $0x80] sm:$0xff]
  %v31 = vld [vmem:[%s1 + $0x88] sm:$0xff]
  %v32 = vld [vmem:[%s1 + $0x90] sm:$0xff]
  %v33 = vld [vmem:[%s1 + $0x98] sm:$0xff]
  %v34 = vld [vmem:[%s1 + $0xa0] sm:$0xff]
  %v35 = vld [vmem:[%s1 + $0xa8] sm:$0xff]
  %v36 = vld [vmem:[%s1 + $0xb0] sm:$0xff]
  %v37 = vld [vmem:[%s1 + $0xb8] sm:$0xff]
  %v38 = vld [vmem:[%s1 + $0xc0] sm:$0xff]
  %v39 = vld [vmem:[%s1 + $0xc8] sm:$0xff]
  %v40 = vld [vmem:[%s1 + $0xd0] sm:$0xff]
  %v41 = vld [vmem:[%s1 + $0xd8] sm:$0xff]
  %v42 = vld [vmem:[%s1 + $0xe0] sm:$0xff]
  %v43 = vld [vmem:[%s1 + $0xe8] sm:$0xff]
  %v44 = vld [vmem:[%s1 + $0xf0] sm:$0xff]
  %v45 = vld [vmem:[%s1 + $0xf8] sm:$0xff]
  %v46 = vld [vmem:[%s2] sm:$0x1]
  %v47 = vld [vmem:[%s0] sm:$0xff]
  %v48 = vld [vmem:[%s0 + $0x8] sm:$0xff]
  %v50 = vlaneseq
  %v51 = vshrl.u32 %v50, 7
  %v52 = vsub.s32 0, %v51
  %v53 = vrot.slane %v46, %v52
  %55 = vmatprep.subr.mxu0 0.0
  %56 = vmatpush1.msra.mxu0 %v29
  %57 = vmatprep.subr.mxu0 0.0
  %58 = vmatpush1.msra.mxu0 %v28
  %59 = vmatprep.subr.mxu0 0.0
  %60 = vmatpush1.msra.mxu0 %v27
  %61 = vmatprep.subr.mxu0 0.0
  %62 = vmatpush1.msra.mxu0 %v26
  %63 = vmatprep.subr.mxu0 0.0
  %64 = vmatpush1.msra.mxu0 %v25
  %65 = vmatprep.subr.mxu0 0.0
  %66 = vmatpush1.msra.mxu0 %v24
  %67 = vmatprep.subr.mxu0 0.0
  %68 = vmatpush1.msra.mxu0 %v23
  %69 = vmatprep.subr.mxu0 0.0
  %70 = vmatpush1.msra.mxu0 %v22
  %71 = vmatprep.subr.mxu0 0.0
  %72 = vmatpush1.msra.mxu0 %v21
  %73 = vmatprep.subr.mxu0 0.0
  %74 = vmatpush1.msra.mxu0 %v20
  %75 = vmatprep.subr.mxu0 0.0
  %76 = vmatpush1.msra.mxu0 %v19
  %77 = vmatprep.subr.mxu0 0.0
  %78 = vmatpush1.msra.mxu0 %v18
  %79 = vmatprep.subr.mxu0 0.0
  %80 = vmatpush1.msra.mxu0 %v17
  %81 = vmatprep.subr.mxu0 0.0
  %82 = vmatpush1.msra.mxu0 %v16
  %83 = vmatprep.subr.mxu0 0.0
  %84 = vmatpush1.msra.mxu0 %v15
  %85 = vmatprep.subr.mxu0 0.0
  %86 = vmatpush1.msra.mxu0 %v14
  %87 = vmatprep.subr.mxu0 0.0
  %88 = vmatpush2.msra.mxu0 %v45
  %89 = vmatprep.subr.mxu0 0.0
  %90 = vmatpush2.msra.mxu0 %v44
  %91 = vmatprep.subr.mxu0 0.0
  %92 = vmatpush2.msra.mxu0 %v43
  %93 = vmatprep.subr.mxu0 0.0
  %94 = vmatpush2.msra.mxu0 %v42
  %95 = vmatprep.subr.mxu0 0.0
  %96 = vmatpush2.msra.mxu0 %v41
  %97 = vmatprep.subr.mxu0 0.0
  %98 = vmatpush2.msra.mxu0 %v40
  %99 = vmatprep.subr.mxu0 0.0
  %100 = vmatpush2.msra.mxu0 %v39
  %101 = vmatprep.subr.mxu0 0.0
  %102 = vmatpush2.msra.mxu0 %v38
  %103 = vmatprep.subr.mxu0 0.0
  %104 = vmatpush2.msra.mxu0 %v37
  %105 = vmatprep.subr.mxu0 0.0
  %106 = vmatpush2.msra.mxu0 %v36
  %107 = vmatprep.subr.mxu0 0.0
  %108 = vmatpush2.msra.mxu0 %v35
  %109 = vmatprep.subr.mxu0 0.0
  %110 = vmatpush2.msra.mxu0 %v34
  %111 = vmatprep.subr.mxu0 0.0
  %112 = vmatpush2.msra.mxu0 %v33
  %113 = vmatprep.subr.mxu0 0.0
  %114 = vmatpush2.msra.mxu0 %v32
  %115 = vmatprep.subr.mxu0 0.0
  %116 = vmatpush2.msra.mxu0 %v31
  %117 = vmatprep.subr.mxu0 0.0
  %118 = vmatpush2.msra.mxu0 %v30
  %119 = vmatprep.mubr.f32.mxu0 %v48
  %120 = vmatmul.mubr.f32.gmra.mxu0 %v47
  %v121 = vpop.f32.mrf.mxu0
  %v122 = vadd.f32 %v53, %v121
  %v123 = vpop.f32.mrf.mxu0
  %124 = vdwg.mxu0
  %v125 = vmax.f32 %v122, 0.0
  %s126 = scalar_lea.vmem %s0, 16
  %v127 = vld [vmem:[%s126] sm:$0xff]
  %v128 = vld [vmem:[%s126 + $0x8] sm:$0xff]
  %129 = vmatprep.subr.mxu0 0.0
  %130 = vmatpush1.msra.mxu0 %v29
  %131 = vmatprep.subr.mxu0 0.0
  %132 = vmatpush1.msra.mxu0 %v28
  %133 = vmatprep.subr.mxu0 0.0
  %134 = vmatpush1.msra.mxu0 %v27
  %135 = vmatprep.subr.mxu0 0.0
  %136 = vmatpush1.msra.mxu0 %v26
  %137 = vmatprep.subr.mxu0 0.0
  %138 = vmatpush1.msra.mxu0 %v25
  %139 = vmatprep.subr.mxu0 0.0
  %140 = vmatpush1.msra.mxu0 %v24
  %141 = vmatprep.subr.mxu0 0.0
  %142 = vmatpush1.msra.mxu0 %v23
  %143 = vmatprep.subr.mxu0 0.0
  %144 = vmatpush1.msra.mxu0 %v22
  %145 = vmatprep.subr.mxu0 0.0
  %146 = vmatpush1.msra.mxu0 %v21
  %147 = vmatprep.subr.mxu0 0.0
  %148 = vmatpush1.msra.mxu0 %v20
  %149 = vmatprep.subr.mxu0 0.0
  %150 = vmatpush1.msra.mxu0 %v19
  %151 = vmatprep.subr.mxu0 0.0
  %152 = vmatpush1.msra.mxu0 %v18
  %153 = vmatprep.subr.mxu0 0.0
  %154 = vmatpush1.msra.mxu0 %v17
  %155 = vmatprep.subr.mxu0 0.0
  %156 = vmatpush1.msra.mxu0 %v16
  %157 = vmatprep.subr.mxu0 0.0
  %158 = vmatpush1.msra.mxu0 %v15
  %159 = vmatprep.subr.mxu0 0.0
  %160 = vmatpush1.msra.mxu0 %v14
  %161 = vmatprep.subr.mxu0 0.0
  %162 = vmatpush2.msra.mxu0 %v45
  %163 = vmatprep.subr.mxu0 0.0
  %164 = vmatpush2.msra.mxu0 %v44
  %165 = vmatprep.subr.mxu0 0.0
  %166 = vmatpush2.msra.mxu0 %v43
  %167 = vmatprep.subr.mxu0 0.0
  %168 = vmatpush2.msra.mxu0 %v42
  %169 = vmatprep.subr.mxu0 0.0
  %170 = vmatpush2.msra.mxu0 %v41
  %171 = vmatprep.subr.mxu0 0.0
  %172 = vmatpush2.msra.mxu0 %v40
  %173 = vmatprep.subr.mxu0 0.0
  %174 = vmatpush2.msra.mxu0 %v39
  %175 = vmatprep.subr.mxu0 0.0
  %176 = vmatpush2.msra.mxu0 %v38
  %177 = vmatprep.subr.mxu0 0.0
  %178 = vmatpush2.msra.mxu0 %v37
  %179 = vmatprep.subr.mxu0 0.0
  %180 = vmatpush2.msra.mxu0 %v36
  %181 = vmatprep.subr.mxu0 0.0
  %182 = vmatpush2.msra.mxu0 %v35
  %183 = vmatprep.subr.mxu0 0.0
  %184 = vmatpush2.msra.mxu0 %v34
  %185 = vmatprep.subr.mxu0 0.0
  %186 = vmatpush2.msra.mxu0 %v33
  %187 = vmatprep.subr.mxu0 0.0
  %188 = vmatpush2.msra.mxu0 %v32
  %189 = vmatprep.subr.mxu0 0.0
  %190 = vmatpush2.msra.mxu0 %v31
  %191 = vmatprep.subr.mxu0 0.0
  %192 = vmatpush2.msra.mxu0 %v30
  %193 = vmatprep.mubr.f32.mxu0 %v128
  %194 = vmatmul.mubr.f32.gmra.mxu0 %v127
  %v195 = vpop.f32.mrf.mxu0
  %v196 = vadd.f32 %v53, %v195
  %v197 = vpop.f32.mrf.mxu0
  %198 = vdwg.mxu0
  %v199 = vmax.f32 %v196, 0.0
  %v200 = vmax.f32 %v125, %v199
  %s201 = scalar_lea.vmem %s0, 32
  %v202 = vld [vmem:[%s201] sm:$0xff]
  %v203 = vld [vmem:[%s201 + $0x8] sm:$0xff]
  %204 = vmatprep.subr.mxu0 0.0
  %205 = vmatpush1.msra.mxu0 %v29
  %206 = vmatprep.subr.mxu0 0.0
  %207 = vmatpush1.msra.mxu0 %v28
  %208 = vmatprep.subr.mxu0 0.0
  %209 = vmatpush1.msra.mxu0 %v27
  %210 = vmatprep.subr.mxu0 0.0
  %211 = vmatpush1.msra.mxu0 %v26
  %212 = vmatprep.subr.mxu0 0.0
  %213 = vmatpush1.msra.mxu0 %v25
  %214 = vmatprep.subr.mxu0 0.0
  %215 = vmatpush1.msra.mxu0 %v24
  %216 = vmatprep.subr.mxu0 0.0
  %217 = vmatpush1.msra.mxu0 %v23
  %218 = vmatprep.subr.mxu0 0.0
  %219 = vmatpush1.msra.mxu0 %v22
  %220 = vmatprep.subr.mxu0 0.0
  %221 = vmatpush1.msra.mxu0 %v21
  %222 = vmatprep.subr.mxu0 0.0
  %223 = vmatpush1.msra.mxu0 %v20
  %224 = vmatprep.subr.mxu0 0.0
  %225 = vmatpush1.msra.mxu0 %v19
  %226 = vmatprep.subr.mxu0 0.0
  %227 = vmatpush1.msra.mxu0 %v18
  %228 = vmatprep.subr.mxu0 0.0
  %229 = vmatpush1.msra.mxu0 %v17
  %230 = vmatprep.subr.mxu0 0.0
  %231 = vmatpush1.msra.mxu0 %v16
  %232 = vmatprep.subr.mxu0 0.0
  %233 = vmatpush1.msra.mxu0 %v15
  %234 = vmatprep.subr.mxu0 0.0
  %235 = vmatpush1.msra.mxu0 %v14
  %236 = vmatprep.subr.mxu0 0.0
  %237 = vmatpush2.msra.mxu0 %v45
  %238 = vmatprep.subr.mxu0 0.0
  %239 = vmatpush2.msra.mxu0 %v44
  %240 = vmatprep.subr.mxu0 0.0
  %241 = vmatpush2.msra.mxu0 %v43
  %242 = vmatprep.subr.mxu0 0.0
  %243 = vmatpush2.msra.mxu0 %v42
  %244 = vmatprep.subr.mxu0 0.0
  %245 = vmatpush2.msra.mxu0 %v41
  %246 = vmatprep.subr.mxu0 0.0
  %247 = vmatpush2.msra.mxu0 %v40
  %248 = vmatprep.subr.mxu0 0.0
  %249 = vmatpush2.msra.mxu0 %v39
  %250 = vmatprep.subr.mxu0 0.0
  %251 = vmatpush2.msra.mxu0 %v38
  %252 = vmatprep.subr.mxu0 0.0
  %253 = vmatpush2.msra.mxu0 %v37
  %254 = vmatprep.subr.mxu0 0.0
  %255 = vmatpush2.msra.mxu0 %v36
  %256 = vmatprep.subr.mxu0 0.0
  %257 = vmatpush2.msra.mxu0 %v35
  %258 = vmatprep.subr.mxu0 0.0
  %259 = vmatpush2.msra.mxu0 %v34
  %260 = vmatprep.subr.mxu0 0.0
  %261 = vmatpush2.msra.mxu0 %v33
  %262 = vmatprep.subr.mxu0 0.0
  %263 = vmatpush2.msra.mxu0 %v32
  %264 = vmatprep.subr.mxu0 0.0
  %265 = vmatpush2.msra.mxu0 %v31
  %266 = vmatprep.subr.mxu0 0.0
  %267 = vmatpush2.msra.mxu0 %v30
  %268 = vmatprep.mubr.f32.mxu0 %v203
  %269 = vmatmul.mubr.f32.gmra.mxu0 %v202
  %v270 = vpop.f32.mrf.mxu0
  %v271 = vadd.f32 %v53, %v270
  %v272 = vpop.f32.mrf.mxu0
  %273 = vdwg.mxu0
  %v274 = vmax.f32 %v271, 0.0
  %v275 = vmax.f32 %v200, %v274
  %s276 = scalar_lea.vmem %s0, 48
  %v277 = vld [vmem:[%s276] sm:$0xff]
  %v278 = vld [vmem:[%s276 + $0x8] sm:$0xff]
  %279 = vmatprep.subr.mxu0 0.0
  %280 = vmatpush1.msra.mxu0 %v29
  %281 = vmatprep.subr.mxu0 0.0
  %282 = vmatpush1.msra.mxu0 %v28
  %283 = vmatprep.subr.mxu0 0.0
  %284 = vmatpush1.msra.mxu0 %v27
  %285 = vmatprep.subr.mxu0 0.0
  %286 = vmatpush1.msra.mxu0 %v26
  %287 = vmatprep.subr.mxu0 0.0
  %288 = vmatpush1.msra.mxu0 %v25
  %289 = vmatprep.subr.mxu0 0.0
  %290 = vmatpush1.msra.mxu0 %v24
  %291 = vmatprep.subr.mxu0 0.0
  %292 = vmatpush1.msra.mxu0 %v23
  %293 = vmatprep.subr.mxu0 0.0
  %294 = vmatpush1.msra.mxu0 %v22
  %295 = vmatprep.subr.mxu0 0.0
  %296 = vmatpush1.msra.mxu0 %v21
  %297 = vmatprep.subr.mxu0 0.0
  %298 = vmatpush1.msra.mxu0 %v20
  %299 = vmatprep.subr.mxu0 0.0
  %300 = vmatpush1.msra.mxu0 %v19
  %301 = vmatprep.subr.mxu0 0.0
  %302 = vmatpush1.msra.mxu0 %v18
  %303 = vmatprep.subr.mxu0 0.0
  %304 = vmatpush1.msra.mxu0 %v17
  %305 = vmatprep.subr.mxu0 0.0
  %306 = vmatpush1.msra.mxu0 %v16
  %307 = vmatprep.subr.mxu0 0.0
  %308 = vmatpush1.msra.mxu0 %v15
  %309 = vmatprep.subr.mxu0 0.0
  %310 = vmatpush1.msra.mxu0 %v14
  %311 = vmatprep.subr.mxu0 0.0
  %312 = vmatpush2.msra.mxu0 %v45
  %313 = vmatprep.subr.mxu0 0.0
  %314 = vmatpush2.msra.mxu0 %v44
  %315 = vmatprep.subr.mxu0 0.0
  %316 = vmatpush2.msra.mxu0 %v43
  %317 = vmatprep.subr.mxu0 0.0
  %318 = vmatpush2.msra.mxu0 %v42
  %319 = vmatprep.subr.mxu0 0.0
  %320 = vmatpush2.msra.mxu0 %v41
  %321 = vmatprep.subr.mxu0 0.0
  %322 = vmatpush2.msra.mxu0 %v40
  %323 = vmatprep.subr.mxu0 0.0
  %324 = vmatpush2.msra.mxu0 %v39
  %325 = vmatprep.subr.mxu0 0.0
  %326 = vmatpush2.msra.mxu0 %v38
  %327 = vmatprep.subr.mxu0 0.0
  %328 = vmatpush2.msra.mxu0 %v37
  %329 = vmatprep.subr.mxu0 0.0
  %330 = vmatpush2.msra.mxu0 %v36
  %331 = vmatprep.subr.mxu0 0.0
  %332 = vmatpush2.msra.mxu0 %v35
  %333 = vmatprep.subr.mxu0 0.0
  %334 = vmatpush2.msra.mxu0 %v34
  %335 = vmatprep.subr.mxu0 0.0
  %336 = vmatpush2.msra.mxu0 %v33
  %337 = vmatprep.subr.mxu0 0.0
  %338 = vmatpush2.msra.mxu0 %v32
  %339 = vmatprep.subr.mxu0 0.0
  %340 = vmatpush2.msra.mxu0 %v31
  %341 = vmatprep.subr.mxu0 0.0
  %342 = vmatpush2.msra.mxu0 %v30
  %343 = vmatprep.mubr.f32.mxu0 %v278
  %344 = vmatmul.mubr.f32.gmra.mxu0 %v277
  %v345 = vpop.f32.mrf.mxu0
  %v346 = vadd.f32 %v53, %v345
  %v347 = vpop.f32.mrf.mxu0
  %348 = vdwg.mxu0
  %v349 = vmax.f32 %v346, 0.0
  %v350 = vmax.f32 %v275, %v349
  %351 = vst [vmem:[%s3] sm:$0xff] %v350
  // Predicated region
  $region14: #{lenet_forward.4} parent=0 // pred_check
    _
  $region15: #{lenet_forward.4} parent=0 // pred_check_branch
    %353 = sbr.rel (0) target = $region17
  $region16: #{lenet_forward.4} parent=0 // pred_region
    _
  $region17: #{lenet_forward.4} parent=0 // pred_fallthru
    _
  // Predicated region
  $region18: #{lenet_forward.4} parent=0 // pred_check
    _
  $region19: #{lenet_forward.4} parent=0 // pred_check_branch
    %355 = sbr.rel (0) target = $region21
  $region20: #{lenet_forward.4} parent=0 // pred_region
    _
  $region21: #{lenet_forward.4} parent=0 // pred_fallthru
    _

</llo_original>
